<compile_context>
chip_gen: v7x
topology: tpu7x:2x2x1
jax: 0.10.0
libtpu: 0.0.40
codegen_flags: <defaults>
</compile_context>

<pallas_src>
import jax
import jax.numpy as jnp
from jax import lax
from jax.experimental import pallas as pl
from jax.experimental.pallas import tpu as pltpu

# ---- small synthetic config ----
B, S, D_MODEL = 2, 8, 32
N_HEADS, D_KV = 4, 8
INNER = N_HEADS * D_KV                     # 32
NUM_ROLES = 8                              # == D_KV in this config
N_TOK = B * S                              # 16 tokens, processed jointly
N_PROJ = 3 * INNER + N_HEADS * NUM_ROLES   # 128 fused projection features (one lane-tile)
LN_EPS = 1e-6
NEG_MASK = -1e30                           # cross-batch mask: exp underflows to exactly 0.0


def tpt_self_attn_kernel(x_ref, lnw_ref, wall_ref, ball_ref, rnt_ref, wo_ref, pb_ref, out_ref):
    x = x_ref[...]                                            # (N_TOK, D_MODEL)

    # --- T5LayerNorm (rms-norm, weight only) ---
    var = jnp.mean(x * x, axis=-1, keepdims=True)
    nx = x * lax.rsqrt(var + LN_EPS) * lnw_ref[...]           # (N_TOK, D_MODEL)

    # --- fused Q|K|V|R projection: one 128-lane-wide MXU matmul + bias ---
    qkvr = jnp.dot(nx, wall_ref[...],
                   preferred_element_type=jnp.float32) + ball_ref[...]   # (N_TOK, 128)

    # Single relayout: features -> rows.  After this every per-head access is a free
    # 8-row-aligned sublane slice (no masked lane slices, no lane concatenation).
    qkvr_t = jnp.transpose(qkvr)                              # (128, N_TOK)

    rnt = rnt_ref[...]                                        # (D_KV, NUM_ROLES)  pre-normalized R^T
    pb = pb_ref[...]                                          # (N_HEADS, N_TOK, N_TOK) block-diag bias

    ctx_rows = []
    for h in range(N_HEADS):                                  # static unroll (4 heads)
        qh = qkvr_t[h * D_KV:(h + 1) * D_KV, :]                               # (D_KV, T)
        kh = qkvr_t[INNER + h * D_KV:INNER + (h + 1) * D_KV, :]               # (D_KV, T)
        vh = qkvr_t[2 * INNER + h * D_KV:2 * INNER + (h + 1) * D_KV, :]       # (D_KV, T)
        rh = qkvr_t[3 * INNER + h * NUM_ROLES:
                    3 * INNER + (h + 1) * NUM_ROLES, :]                       # (ROLES, T)

        # scores over all B*S tokens at once (T5-style, no 1/sqrt(d) scaling).
        # Cross-batch entries carry -1e30 via pb, so their softmax weight is exactly 0.
        scores = lax.dot_general(qh, kh, (((0,), (0,)), ((), ())),
                                 preferred_element_type=jnp.float32)          # (Tq, Tk)
        scores = scores + pb[h]
        scores = scores - jnp.max(scores, axis=-1, keepdims=True)
        e = jnp.exp(scores)
        w = e * pl.reciprocal(jnp.sum(e, axis=-1, keepdims=True), approx=True)

        # v_bar^T : contract over key tokens (rhs used transposed -> MXU/relayout handles it)
        v_bar_t = lax.dot_general(vh, w, (((1,), (1,)), ((), ())),
                                  preferred_element_type=jnp.float32)         # (D_KV, Tq)

        # role softmax over NUM_ROLES (sublane direction), shared normalized role matrix
        rs = rh - jnp.max(rh, axis=0, keepdims=True)
        re = jnp.exp(rs)
        rw = re * pl.reciprocal(jnp.sum(re, axis=0, keepdims=True), approx=True)  # (ROLES, T)
        sel_t = jnp.dot(rnt, rw, preferred_element_type=jnp.float32)              # (D_KV, T)

        # hadamard TPR binding + filler residual:  tpr + v_bar == v_bar * (sel + 1)
        ctx_rows.append(v_bar_t * (sel_t + 1.0))

    ctx_t = jnp.concatenate(ctx_rows, axis=0)                 # (INNER, T), rows = (head, d_kv)

    # output projection, contracting the feature rows  (== unshape(tpr + v_bar) @ Wo^T)
    y = lax.dot_general(ctx_t, wo_ref[...], (((0,), (0,)), ((), ())),
                        preferred_element_type=jnp.float32)   # (N_TOK, D_MODEL)

    # residual with the *unnormalized* hidden states (dropout is identity in eval)
    out_ref[...] = x + y


def tpt_layer_self_attention(hidden_states, params, position_bias):
    # --- wrapper-side layout plumbing (tiny, outside the kernel) ---
    x2 = hidden_states.reshape(N_TOK, D_MODEL)
    w_all = jnp.concatenate(
        [params["wq_t"], params["wk_t"], params["wv_t"], params["wr_t"]], axis=1)     # (32, 128)
    b_all = jnp.concatenate(
        [jnp.zeros((3 * INNER,), jnp.float32), params["br"]]).reshape(1, N_PROJ)      # (1, 128)
    lnw = params["ln_w"].reshape(1, D_MODEL)
    R = params["R"]
    rnt = (R / jnp.linalg.norm(R, axis=1, keepdims=True)).T                            # (D_KV, ROLES)

    # block-diagonal position bias over the flattened token axis; cross-batch entries
    # get -1e30 so the joint softmax in the kernel equals the per-batch softmax exactly.
    pb_h = position_bias[0]                                                            # (H, S, S)
    same_batch = jnp.eye(B, dtype=bool)[:, None, :, None]                              # (B,1,B,1)
    pb_full = jnp.where(same_batch, pb_h[:, None, :, None, :], NEG_MASK)               # (H,B,S,B,S)
    pb_full = pb_full.reshape(N_HEADS, N_TOK, N_TOK).astype(jnp.float32)

    vmem = pl.BlockSpec(memory_space=pltpu.MemorySpace.VMEM)
    out2 = pl.pallas_call(
        tpt_self_attn_kernel,
        out_shape=jax.ShapeDtypeStruct((N_TOK, D_MODEL), jnp.float32),
        in_specs=[vmem, vmem, vmem, vmem, vmem, vmem, vmem],
        out_specs=vmem,
    )(x2, lnw, w_all, b_all, rnt, params["wo_t"], pb_full)
    return out2.reshape(B, S, D_MODEL)


def reference_jax(hidden_states, params, position_bias):
    """Pure-JAX mirror of the PyTorch forward for verification."""
    x = hidden_states
    var = jnp.mean(x * x, axis=-1, keepdims=True)
    nx = x / jnp.sqrt(var + LN_EPS) * params["ln_w"]

    def shape(t):  # (B,S,INNER) -> (B,H,S,D_KV)
        return t.reshape(B, -1, N_HEADS, D_KV).transpose(0, 2, 1, 3)

    q = shape(nx @ params["wq_t"])
    k = shape(nx @ params["wk_t"])
    v = shape(nx @ params["wv_t"])
    scores = jnp.einsum('bnqd,bnkd->bnqk', q, k) + position_bias
    weights = jax.nn.softmax(scores, axis=-1)
    v_bar = jnp.einsum('bnqk,bnkd->bnqd', weights, v)

    role_matrix = params["R"] / jnp.linalg.norm(params["R"], axis=1, keepdims=True)
    role_scores = (nx @ params["wr_t"] + params["br"]).reshape(
        B, -1, N_HEADS, NUM_ROLES).transpose(0, 2, 1, 3)
    rw = jax.nn.softmax(role_scores, axis=-1)
    sel = jnp.einsum('bnqr,rd->bnqd', rw, role_matrix)

    tpr = v_bar * sel
    context = (tpr + v_bar).transpose(0, 2, 1, 3).reshape(B, -1, INNER)
    y = context @ params["wo_t"]
    return x + y


def make_params(key):
    ks = jax.random.split(key, 8)
    return {
        "ln_w": jnp.ones((D_MODEL,), jnp.float32),  # T5LayerNorm init
        "wq_t": 0.05 * jax.random.normal(ks[0], (D_MODEL, INNER), jnp.float32),
        "wk_t": 0.05 * jax.random.normal(ks[1], (D_MODEL, INNER), jnp.float32),
        "wv_t": 0.05 * jax.random.normal(ks[2], (D_MODEL, INNER), jnp.float32),
        "wr_t": 0.05 * jax.random.normal(ks[3], (D_MODEL, N_HEADS * NUM_ROLES), jnp.float32),
        "br":   0.02 * jax.random.normal(ks[4], (N_HEADS * NUM_ROLES,), jnp.float32),
        "R":    0.30 * jax.random.normal(ks[5], (NUM_ROLES, D_KV), jnp.float32),  # ~xavier
        "wo_t": 0.05 * jax.random.normal(ks[6], (INNER, D_MODEL), jnp.float32),
    }


# TODO(synk): decoder KV-cache (past_key_value_state/use_cache), head pruning / head_mask,
# tpr_gate, full_tensor_product binding, and has_relative_attention_bias (compute_bias)
# branches are not exercised by this config.

if __name__ == "__main__":
    key = jax.random.PRNGKey(0)
    k_in, k_pb, k_par = jax.random.split(key, 3)

    hidden_states = jax.random.normal(k_in, (B, S, D_MODEL), jnp.float32)
    position_bias = 0.1 * jax.random.normal(k_pb, (1, N_HEADS, S, S), jnp.float32)
    params = make_params(k_par)

    out = jax.jit(tpt_layer_self_attention)(hidden_states, params, position_bias)
    out = jax.block_until_ready(out)

    ref = reference_jax(hidden_states, params, position_bias)
    assert out.shape == (B, S, D_MODEL)
    # tolerance covers the approximate (EUP) softmax reciprocals
    assert jnp.allclose(out, ref, atol=5e-3, rtol=5e-3), \
        f"max abs err {jnp.max(jnp.abs(out - ref))}"

    print("KERNEL_OK")
</pallas_src>

<mosaic_0001>
module attributes {stable_mosaic.version = 11 : i64} {
  func.func @tpt_self_attn_kernel(%arg0: memref<16x32xf32, #tpu.memory_space<vmem>>, %arg1: memref<1x32xf32, #tpu.memory_space<vmem>>, %arg2: memref<32x128xf32, #tpu.memory_space<vmem>>, %arg3: memref<1x128xf32, #tpu.memory_space<vmem>>, %arg4: memref<8x8xf32, #tpu.memory_space<vmem>>, %arg5: memref<32x32xf32, #tpu.memory_space<vmem>>, %arg6: memref<4x16x16xf32, #tpu.memory_space<vmem>>, %arg7: memref<16x32xf32, #tpu.memory_space<vmem>>) attributes {dimension_semantics = [], scalar_prefetch = 0 : i64, scratch_operands = 0 : i64, tpu.core_type = #tpu.core_type<tc>} {
    %c0 = arith.constant 0 : index
    %c0_0 = arith.constant 0 : index
    %0 = vector.load %arg0[%c0, %c0_0] : memref<16x32xf32, #tpu.memory_space<vmem>>, vector<16x32xf32>
    %1 = arith.mulf %0, %0 : vector<16x32xf32>
    %cst = arith.constant dense<0.000000e+00> : vector<16xf32>
    %2 = vector.multi_reduction <add>, %1, %cst [1] : vector<16x32xf32> to vector<16xf32>
    %3 = vector.shape_cast %2 : vector<16xf32> to vector<16x1xf32>
    %cst_1 = arith.constant 3.200000e+01 : f32
    %4 = vector.broadcast %cst_1 : f32 to vector<16x1xf32>
    %5 = arith.divf %3, %4 : vector<16x1xf32>
    %cst_2 = arith.constant 9.99999997E-7 : f32
    %6 = vector.broadcast %cst_2 : f32 to vector<16x1xf32>
    %7 = arith.addf %5, %6 : vector<16x1xf32>
    %8 = math.rsqrt %7 : vector<16x1xf32>
    %9 = vector.broadcast %8 : vector<16x1xf32> to vector<16x32xf32>
    %10 = arith.mulf %0, %9 : vector<16x32xf32>
    %c0_3 = arith.constant 0 : index
    %c0_4 = arith.constant 0 : index
    %11 = vector.load %arg1[%c0_3, %c0_4] : memref<1x32xf32, #tpu.memory_space<vmem>>, vector<1x32xf32>
    %12 = vector.broadcast %11 : vector<1x32xf32> to vector<16x32xf32>
    %13 = arith.mulf %10, %12 : vector<16x32xf32>
    %c0_5 = arith.constant 0 : index
    %c0_6 = arith.constant 0 : index
    %14 = vector.load %arg2[%c0_5, %c0_6] : memref<32x128xf32, #tpu.memory_space<vmem>>, vector<32x128xf32>
    %cst_7 = arith.constant dense<0.000000e+00> : vector<16x128xf32>
    %15 = tpu.matmul %13, %14, %cst_7 {dimension_numbers = #tpu.dot_dimension_numbers<[1], [0], [0], [1], [0, 0, 1, 1], [], []>} : vector<16x32xf32>, vector<32x128xf32>, vector<16x128xf32> -> vector<16x128xf32>
    %c0_8 = arith.constant 0 : index
    %c0_9 = arith.constant 0 : index
    %16 = vector.load %arg3[%c0_8, %c0_9] : memref<1x128xf32, #tpu.memory_space<vmem>>, vector<1x128xf32>
    %17 = vector.broadcast %16 : vector<1x128xf32> to vector<16x128xf32>
    %18 = arith.addf %15, %17 : vector<16x128xf32>
    %19 = tpu.transpose %18, [1, 0] : vector<16x128xf32> -> vector<128x16xf32>
    %c0_10 = arith.constant 0 : index
    %c0_11 = arith.constant 0 : index
    %20 = vector.load %arg4[%c0_10, %c0_11] : memref<8x8xf32, #tpu.memory_space<vmem>>, vector<8x8xf32>
    %c0_12 = arith.constant 0 : index
    %c0_13 = arith.constant 0 : index
    %c0_14 = arith.constant 0 : index
    %21 = vector.load %arg6[%c0_12, %c0_13, %c0_14] : memref<4x16x16xf32, #tpu.memory_space<vmem>>, vector<4x16x16xf32>
    %22 = vector.extract_strided_slice %19 {offsets = [0, 0], sizes = [8, 16], strides = [1, 1]} : vector<128x16xf32> to vector<8x16xf32>
    %23 = vector.extract_strided_slice %19 {offsets = [32, 0], sizes = [8, 16], strides = [1, 1]} : vector<128x16xf32> to vector<8x16xf32>
    %24 = vector.extract_strided_slice %19 {offsets = [64, 0], sizes = [8, 16], strides = [1, 1]} : vector<128x16xf32> to vector<8x16xf32>
    %25 = vector.extract_strided_slice %19 {offsets = [96, 0], sizes = [8, 16], strides = [1, 1]} : vector<128x16xf32> to vector<8x16xf32>
    %cst_15 = arith.constant dense<0.000000e+00> : vector<16x16xf32>
    %26 = tpu.matmul %22, %23, %cst_15 {dimension_numbers = #tpu.dot_dimension_numbers<[0], [0], [1], [1], [0, 1, 1, 1], [], []>} : vector<8x16xf32>, vector<8x16xf32>, vector<16x16xf32> -> vector<16x16xf32>
    %27 = vector.extract_strided_slice %21 {offsets = [0, 0, 0], sizes = [1, 16, 16], strides = [1, 1, 1]} : vector<4x16x16xf32> to vector<1x16x16xf32>
    %28 = vector.shape_cast %27 : vector<1x16x16xf32> to vector<16x16xf32>
    %29 = arith.addf %26, %28 : vector<16x16xf32>
    %cst_16 = arith.constant dense<0xFF800000> : vector<16xf32>
    %30 = vector.multi_reduction <maximumf>, %29, %cst_16 [1] : vector<16x16xf32> to vector<16xf32>
    %31 = vector.shape_cast %30 : vector<16xf32> to vector<16x1xf32>
    %32 = vector.broadcast %31 : vector<16x1xf32> to vector<16x16xf32>
    %33 = arith.subf %29, %32 : vector<16x16xf32>
    %34 = math.exp %33 : vector<16x16xf32>
    %cst_17 = arith.constant dense<0.000000e+00> : vector<16xf32>
    %35 = vector.multi_reduction <add>, %34, %cst_17 [1] : vector<16x16xf32> to vector<16xf32>
    %36 = vector.shape_cast %35 : vector<16xf32> to vector<16x1xf32>
    %37 = tpu.reciprocal %36 {approx = true} : vector<16x1xf32> -> vector<16x1xf32>
    %38 = vector.broadcast %37 : vector<16x1xf32> to vector<16x16xf32>
    %39 = arith.mulf %34, %38 : vector<16x16xf32>
    %cst_18 = arith.constant dense<0.000000e+00> : vector<8x16xf32>
    %40 = tpu.matmul %24, %39, %cst_18 {dimension_numbers = #tpu.dot_dimension_numbers<[1], [1], [0], [0], [0, 0, 1, 0], [], []>} : vector<8x16xf32>, vector<16x16xf32>, vector<8x16xf32> -> vector<8x16xf32>
    %cst_19 = arith.constant dense<0xFF800000> : vector<16xf32>
    %41 = vector.multi_reduction <maximumf>, %25, %cst_19 [0] : vector<8x16xf32> to vector<16xf32>
    %42 = vector.shape_cast %41 : vector<16xf32> to vector<1x16xf32>
    %43 = vector.broadcast %42 : vector<1x16xf32> to vector<8x16xf32>
    %44 = arith.subf %25, %43 : vector<8x16xf32>
    %45 = math.exp %44 : vector<8x16xf32>
    %cst_20 = arith.constant dense<0.000000e+00> : vector<16xf32>
    %46 = vector.multi_reduction <add>, %45, %cst_20 [0] : vector<8x16xf32> to vector<16xf32>
    %47 = vector.shape_cast %46 : vector<16xf32> to vector<1x16xf32>
    %48 = tpu.reciprocal %47 {approx = true} : vector<1x16xf32> -> vector<1x16xf32>
    %49 = vector.broadcast %48 : vector<1x16xf32> to vector<8x16xf32>
    %50 = arith.mulf %45, %49 : vector<8x16xf32>
    %cst_21 = arith.constant dense<0.000000e+00> : vector<8x16xf32>
    %51 = tpu.matmul %20, %50, %cst_21 {dimension_numbers = #tpu.dot_dimension_numbers<[1], [0], [0], [1], [0, 0, 1, 1], [], []>} : vector<8x8xf32>, vector<8x16xf32>, vector<8x16xf32> -> vector<8x16xf32>
    %cst_22 = arith.constant 1.000000e+00 : f32
    %52 = vector.broadcast %cst_22 : f32 to vector<8x16xf32>
    %53 = arith.addf %51, %52 : vector<8x16xf32>
    %54 = arith.mulf %40, %53 : vector<8x16xf32>
    %55 = vector.extract_strided_slice %19 {offsets = [8, 0], sizes = [8, 16], strides = [1, 1]} : vector<128x16xf32> to vector<8x16xf32>
    %56 = vector.extract_strided_slice %19 {offsets = [40, 0], sizes = [8, 16], strides = [1, 1]} : vector<128x16xf32> to vector<8x16xf32>
    %57 = vector.extract_strided_slice %19 {offsets = [72, 0], sizes = [8, 16], strides = [1, 1]} : vector<128x16xf32> to vector<8x16xf32>
    %58 = vector.extract_strided_slice %19 {offsets = [104, 0], sizes = [8, 16], strides = [1, 1]} : vector<128x16xf32> to vector<8x16xf32>
    %cst_23 = arith.constant dense<0.000000e+00> : vector<16x16xf32>
    %59 = tpu.matmul %55, %56, %cst_23 {dimension_numbers = #tpu.dot_dimension_numbers<[0], [0], [1], [1], [0, 1, 1, 1], [], []>} : vector<8x16xf32>, vector<8x16xf32>, vector<16x16xf32> -> vector<16x16xf32>
    %60 = vector.extract_strided_slice %21 {offsets = [1, 0, 0], sizes = [1, 16, 16], strides = [1, 1, 1]} : vector<4x16x16xf32> to vector<1x16x16xf32>
    %61 = vector.shape_cast %60 : vector<1x16x16xf32> to vector<16x16xf32>
    %62 = arith.addf %59, %61 : vector<16x16xf32>
    %cst_24 = arith.constant dense<0xFF800000> : vector<16xf32>
    %63 = vector.multi_reduction <maximumf>, %62, %cst_24 [1] : vector<16x16xf32> to vector<16xf32>
    %64 = vector.shape_cast %63 : vector<16xf32> to vector<16x1xf32>
    %65 = vector.broadcast %64 : vector<16x1xf32> to vector<16x16xf32>
    %66 = arith.subf %62, %65 : vector<16x16xf32>
    %67 = math.exp %66 : vector<16x16xf32>
    %cst_25 = arith.constant dense<0.000000e+00> : vector<16xf32>
    %68 = vector.multi_reduction <add>, %67, %cst_25 [1] : vector<16x16xf32> to vector<16xf32>
    %69 = vector.shape_cast %68 : vector<16xf32> to vector<16x1xf32>
    %70 = tpu.reciprocal %69 {approx = true} : vector<16x1xf32> -> vector<16x1xf32>
    %71 = vector.broadcast %70 : vector<16x1xf32> to vector<16x16xf32>
    %72 = arith.mulf %67, %71 : vector<16x16xf32>
    %cst_26 = arith.constant dense<0.000000e+00> : vector<8x16xf32>
    %73 = tpu.matmul %57, %72, %cst_26 {dimension_numbers = #tpu.dot_dimension_numbers<[1], [1], [0], [0], [0, 0, 1, 0], [], []>} : vector<8x16xf32>, vector<16x16xf32>, vector<8x16xf32> -> vector<8x16xf32>
    %cst_27 = arith.constant dense<0xFF800000> : vector<16xf32>
    %74 = vector.multi_reduction <maximumf>, %58, %cst_27 [0] : vector<8x16xf32> to vector<16xf32>
    %75 = vector.shape_cast %74 : vector<16xf32> to vector<1x16xf32>
    %76 = vector.broadcast %75 : vector<1x16xf32> to vector<8x16xf32>
    %77 = arith.subf %58, %76 : vector<8x16xf32>
    %78 = math.exp %77 : vector<8x16xf32>
    %cst_28 = arith.constant dense<0.000000e+00> : vector<16xf32>
    %79 = vector.multi_reduction <add>, %78, %cst_28 [0] : vector<8x16xf32> to vector<16xf32>
    %80 = vector.shape_cast %79 : vector<16xf32> to vector<1x16xf32>
    %81 = tpu.reciprocal %80 {approx = true} : vector<1x16xf32> -> vector<1x16xf32>
    %82 = vector.broadcast %81 : vector<1x16xf32> to vector<8x16xf32>
    %83 = arith.mulf %78, %82 : vector<8x16xf32>
    %cst_29 = arith.constant dense<0.000000e+00> : vector<8x16xf32>
    %84 = tpu.matmul %20, %83, %cst_29 {dimension_numbers = #tpu.dot_dimension_numbers<[1], [0], [0], [1], [0, 0, 1, 1], [], []>} : vector<8x8xf32>, vector<8x16xf32>, vector<8x16xf32> -> vector<8x16xf32>
    %cst_30 = arith.constant 1.000000e+00 : f32
    %85 = vector.broadcast %cst_30 : f32 to vector<8x16xf32>
    %86 = arith.addf %84, %85 : vector<8x16xf32>
    %87 = arith.mulf %73, %86 : vector<8x16xf32>
    %88 = vector.extract_strided_slice %19 {offsets = [16, 0], sizes = [8, 16], strides = [1, 1]} : vector<128x16xf32> to vector<8x16xf32>
    %89 = vector.extract_strided_slice %19 {offsets = [48, 0], sizes = [8, 16], strides = [1, 1]} : vector<128x16xf32> to vector<8x16xf32>
    %90 = vector.extract_strided_slice %19 {offsets = [80, 0], sizes = [8, 16], strides = [1, 1]} : vector<128x16xf32> to vector<8x16xf32>
    %91 = vector.extract_strided_slice %19 {offsets = [112, 0], sizes = [8, 16], strides = [1, 1]} : vector<128x16xf32> to vector<8x16xf32>
    %cst_31 = arith.constant dense<0.000000e+00> : vector<16x16xf32>
    %92 = tpu.matmul %88, %89, %cst_31 {dimension_numbers = #tpu.dot_dimension_numbers<[0], [0], [1], [1], [0, 1, 1, 1], [], []>} : vector<8x16xf32>, vector<8x16xf32>, vector<16x16xf32> -> vector<16x16xf32>
    %93 = vector.extract_strided_slice %21 {offsets = [2, 0, 0], sizes = [1, 16, 16], strides = [1, 1, 1]} : vector<4x16x16xf32> to vector<1x16x16xf32>
    %94 = vector.shape_cast %93 : vector<1x16x16xf32> to vector<16x16xf32>
    %95 = arith.addf %92, %94 : vector<16x16xf32>
    %cst_32 = arith.constant dense<0xFF800000> : vector<16xf32>
    %96 = vector.multi_reduction <maximumf>, %95, %cst_32 [1] : vector<16x16xf32> to vector<16xf32>
    %97 = vector.shape_cast %96 : vector<16xf32> to vector<16x1xf32>
    %98 = vector.broadcast %97 : vector<16x1xf32> to vector<16x16xf32>
    %99 = arith.subf %95, %98 : vector<16x16xf32>
    %100 = math.exp %99 : vector<16x16xf32>
    %cst_33 = arith.constant dense<0.000000e+00> : vector<16xf32>
    %101 = vector.multi_reduction <add>, %100, %cst_33 [1] : vector<16x16xf32> to vector<16xf32>
    %102 = vector.shape_cast %101 : vector<16xf32> to vector<16x1xf32>
    %103 = tpu.reciprocal %102 {approx = true} : vector<16x1xf32> -> vector<16x1xf32>
    %104 = vector.broadcast %103 : vector<16x1xf32> to vector<16x16xf32>
    %105 = arith.mulf %100, %104 : vector<16x16xf32>
    %cst_34 = arith.constant dense<0.000000e+00> : vector<8x16xf32>
    %106 = tpu.matmul %90, %105, %cst_34 {dimension_numbers = #tpu.dot_dimension_numbers<[1], [1], [0], [0], [0, 0, 1, 0], [], []>} : vector<8x16xf32>, vector<16x16xf32>, vector<8x16xf32> -> vector<8x16xf32>
    %cst_35 = arith.constant dense<0xFF800000> : vector<16xf32>
    %107 = vector.multi_reduction <maximumf>, %91, %cst_35 [0] : vector<8x16xf32> to vector<16xf32>
    %108 = vector.shape_cast %107 : vector<16xf32> to vector<1x16xf32>
    %109 = vector.broadcast %108 : vector<1x16xf32> to vector<8x16xf32>
    %110 = arith.subf %91, %109 : vector<8x16xf32>
    %111 = math.exp %110 : vector<8x16xf32>
    %cst_36 = arith.constant dense<0.000000e+00> : vector<16xf32>
    %112 = vector.multi_reduction <add>, %111, %cst_36 [0] : vector<8x16xf32> to vector<16xf32>
    %113 = vector.shape_cast %112 : vector<16xf32> to vector<1x16xf32>
    %114 = tpu.reciprocal %113 {approx = true} : vector<1x16xf32> -> vector<1x16xf32>
    %115 = vector.broadcast %114 : vector<1x16xf32> to vector<8x16xf32>
    %116 = arith.mulf %111, %115 : vector<8x16xf32>
    %cst_37 = arith.constant dense<0.000000e+00> : vector<8x16xf32>
    %117 = tpu.matmul %20, %116, %cst_37 {dimension_numbers = #tpu.dot_dimension_numbers<[1], [0], [0], [1], [0, 0, 1, 1], [], []>} : vector<8x8xf32>, vector<8x16xf32>, vector<8x16xf32> -> vector<8x16xf32>
    %cst_38 = arith.constant 1.000000e+00 : f32
    %118 = vector.broadcast %cst_38 : f32 to vector<8x16xf32>
    %119 = arith.addf %117, %118 : vector<8x16xf32>
    %120 = arith.mulf %106, %119 : vector<8x16xf32>
    %121 = vector.extract_strided_slice %19 {offsets = [24, 0], sizes = [8, 16], strides = [1, 1]} : vector<128x16xf32> to vector<8x16xf32>
    %122 = vector.extract_strided_slice %19 {offsets = [56, 0], sizes = [8, 16], strides = [1, 1]} : vector<128x16xf32> to vector<8x16xf32>
    %123 = vector.extract_strided_slice %19 {offsets = [88, 0], sizes = [8, 16], strides = [1, 1]} : vector<128x16xf32> to vector<8x16xf32>
    %124 = vector.extract_strided_slice %19 {offsets = [120, 0], sizes = [8, 16], strides = [1, 1]} : vector<128x16xf32> to vector<8x16xf32>
    %cst_39 = arith.constant dense<0.000000e+00> : vector<16x16xf32>
    %125 = tpu.matmul %121, %122, %cst_39 {dimension_numbers = #tpu.dot_dimension_numbers<[0], [0], [1], [1], [0, 1, 1, 1], [], []>} : vector<8x16xf32>, vector<8x16xf32>, vector<16x16xf32> -> vector<16x16xf32>
    %126 = vector.extract_strided_slice %21 {offsets = [3, 0, 0], sizes = [1, 16, 16], strides = [1, 1, 1]} : vector<4x16x16xf32> to vector<1x16x16xf32>
    %127 = vector.shape_cast %126 : vector<1x16x16xf32> to vector<16x16xf32>
    %128 = arith.addf %125, %127 : vector<16x16xf32>
    %cst_40 = arith.constant dense<0xFF800000> : vector<16xf32>
    %129 = vector.multi_reduction <maximumf>, %128, %cst_40 [1] : vector<16x16xf32> to vector<16xf32>
    %130 = vector.shape_cast %129 : vector<16xf32> to vector<16x1xf32>
    %131 = vector.broadcast %130 : vector<16x1xf32> to vector<16x16xf32>
    %132 = arith.subf %128, %131 : vector<16x16xf32>
    %133 = math.exp %132 : vector<16x16xf32>
    %cst_41 = arith.constant dense<0.000000e+00> : vector<16xf32>
    %134 = vector.multi_reduction <add>, %133, %cst_41 [1] : vector<16x16xf32> to vector<16xf32>
    %135 = vector.shape_cast %134 : vector<16xf32> to vector<16x1xf32>
    %136 = tpu.reciprocal %135 {approx = true} : vector<16x1xf32> -> vector<16x1xf32>
    %137 = vector.broadcast %136 : vector<16x1xf32> to vector<16x16xf32>
    %138 = arith.mulf %133, %137 : vector<16x16xf32>
    %cst_42 = arith.constant dense<0.000000e+00> : vector<8x16xf32>
    %139 = tpu.matmul %123, %138, %cst_42 {dimension_numbers = #tpu.dot_dimension_numbers<[1], [1], [0], [0], [0, 0, 1, 0], [], []>} : vector<8x16xf32>, vector<16x16xf32>, vector<8x16xf32> -> vector<8x16xf32>
    %cst_43 = arith.constant dense<0xFF800000> : vector<16xf32>
    %140 = vector.multi_reduction <maximumf>, %124, %cst_43 [0] : vector<8x16xf32> to vector<16xf32>
    %141 = vector.shape_cast %140 : vector<16xf32> to vector<1x16xf32>
    %142 = vector.broadcast %141 : vector<1x16xf32> to vector<8x16xf32>
    %143 = arith.subf %124, %142 : vector<8x16xf32>
    %144 = math.exp %143 : vector<8x16xf32>
    %cst_44 = arith.constant dense<0.000000e+00> : vector<16xf32>
    %145 = vector.multi_reduction <add>, %144, %cst_44 [0] : vector<8x16xf32> to vector<16xf32>
    %146 = vector.shape_cast %145 : vector<16xf32> to vector<1x16xf32>
    %147 = tpu.reciprocal %146 {approx = true} : vector<1x16xf32> -> vector<1x16xf32>
    %148 = vector.broadcast %147 : vector<1x16xf32> to vector<8x16xf32>
    %149 = arith.mulf %144, %148 : vector<8x16xf32>
    %cst_45 = arith.constant dense<0.000000e+00> : vector<8x16xf32>
    %150 = tpu.matmul %20, %149, %cst_45 {dimension_numbers = #tpu.dot_dimension_numbers<[1], [0], [0], [1], [0, 0, 1, 1], [], []>} : vector<8x8xf32>, vector<8x16xf32>, vector<8x16xf32> -> vector<8x16xf32>
    %cst_46 = arith.constant 1.000000e+00 : f32
    %151 = vector.broadcast %cst_46 : f32 to vector<8x16xf32>
    %152 = arith.addf %150, %151 : vector<8x16xf32>
    %153 = arith.mulf %139, %152 : vector<8x16xf32>
    %154 = tpu.concatenate %54, %87, %120, %153 in 0 : vector<8x16xf32>, vector<8x16xf32>, vector<8x16xf32>, vector<8x16xf32> -> vector<32x16xf32>
    %c0_47 = arith.constant 0 : index
    %c0_48 = arith.constant 0 : index
    %155 = vector.load %arg5[%c0_47, %c0_48] : memref<32x32xf32, #tpu.memory_space<vmem>>, vector<32x32xf32>
    %cst_49 = arith.constant dense<0.000000e+00> : vector<16x32xf32>
    %156 = tpu.matmul %154, %155, %cst_49 {dimension_numbers = #tpu.dot_dimension_numbers<[0], [0], [1], [1], [0, 1, 1, 1], [], []>} : vector<32x16xf32>, vector<32x32xf32>, vector<16x32xf32> -> vector<16x32xf32>
    %157 = arith.addf %0, %156 : vector<16x32xf32>
    %c0_50 = arith.constant 0 : index
    %c0_51 = arith.constant 0 : index
    %158 = vector.load %arg7[%c0_50, %c0_51] : memref<16x32xf32, #tpu.memory_space<vmem>>, vector<16x32xf32>
    tpu.vector_store %arg7[%c0_50, %c0_51], %157 {strides = array<i32>} : memref<16x32xf32, #tpu.memory_space<vmem>>, vector<16x32xf32>,
    return
  }
}

</mosaic_0001>

<llo_original>
// kernel: tpt_layer_self_attention.1
$region0: #{tpt_layer_self_attention.1}
  #allocation0 [shape = 'u32[]', space=smem, size = 0x4, offset = 0x4, fixed_abs, tag = 'smem constant byte address 0x4 - core index']
  #allocation1 [shape = 'u32[144,128]{1,0:T(1,128)}', space=vmem, size = 0x12000, scoped, tag = 'internal scratch']
  %s0 = inlined_call_operand.vmem [shape: f32[16,32], index: 0, kind: input, shape index: {}]
  %s1 = inlined_call_operand.vmem [shape: f32[1,32], index: 1, kind: input, shape index: {}]
  %s2 = inlined_call_operand.vmem [shape: f32[32,128], index: 2, kind: input, shape index: {}]
  %s3 = inlined_call_operand.vmem [shape: f32[1,128], index: 3, kind: input, shape index: {}]
  %s4 = inlined_call_operand.vmem [shape: f32[8,8], index: 4, kind: input, shape index: {}]
  %s5 = inlined_call_operand.vmem [shape: f32[32,32], index: 5, kind: input, shape index: {}]
  %s6 = inlined_call_operand.vmem [shape: f32[4,16,16], index: 6, kind: input, shape index: {}]
  %s7 = inlined_call_operand.hbm [shape: f32[16,32], index: 7, kind: output, shape index: {}]
  %s8 = sld [smem:[#allocation0]]
  $region38: #{tpt_layer_self_attention.1} parent=0
    _
  %s10 = ssub.s32 1, %s8
  %s11 = scalar_select 0, %s10, %s8
  $region1: #{tpt_layer_self_attention.1} parent=0
    #allocation2 [shape = 'u8[8192]{0}', space=vmem, size = 0x2000, scoped, tag = 'output window, operand 0, single buffered']
    #allocation3 [shape = 's32[1]{0}', space=sflag, size = 0x4, scoped, tag = 'scoped memory for tpt_layer_self_attention.1']
    %12 = vsyncpa [#allocation3], 0
    // Predicated region
    $region2: #{tpt_layer_self_attention.1} parent=1 // pred_check
      _
    $region3: #{tpt_layer_self_attention.1} parent=1 // pred_check_branch
      %14 = sbr.rel (0) target = $region5
    $region4: #{tpt_layer_self_attention.1} parent=1 // pred_region
      _
    $region5: #{tpt_layer_self_attention.1} parent=1 // pred_fallthru
      _
    // Predicated region
    $region6: #{tpt_layer_self_attention.1} parent=1 // pred_check
      _
    $region7: #{tpt_layer_self_attention.1} parent=1 // pred_check_branch
      %16 = sbr.rel (0) target = $region9
    $region8: #{tpt_layer_self_attention.1} parent=1 // pred_region
      _
    $region9: #{tpt_layer_self_attention.1} parent=1 // pred_fallthru
      _
    // Predicated region
    $region10: #{tpt_layer_self_attention.1} parent=1 // pred_check
      _
    $region11: #{tpt_layer_self_attention.1} parent=1 // pred_check_branch
      %18 = sbr.rel (0) target = $region13
    $region12: #{tpt_layer_self_attention.1} parent=1 // pred_region
      _
    $region13: #{tpt_layer_self_attention.1} parent=1 // pred_fallthru
      _
    // Predicated region
    $region14: #{tpt_layer_self_attention.1} parent=1 // pred_check
      _
    $region15: #{tpt_layer_self_attention.1} parent=1 // pred_check_branch
      %20 = sbr.rel (0) target = $region17
    $region16: #{tpt_layer_self_attention.1} parent=1 // pred_region
      _
    $region17: #{tpt_layer_self_attention.1} parent=1 // pred_fallthru
      _
    // Predicated region
    $region18: #{tpt_layer_self_attention.1} parent=1 // pred_check
      _
    $region19: #{tpt_layer_self_attention.1} parent=1 // pred_check_branch
      %22 = sbr.rel (0) target = $region21
    $region20: #{tpt_layer_self_attention.1} parent=1 // pred_region
      _
    $region21: #{tpt_layer_self_attention.1} parent=1 // pred_fallthru
      _
    // Predicated region
    $region22: #{tpt_layer_self_attention.1} parent=1 // pred_check
      _
    $region23: #{tpt_layer_self_attention.1} parent=1 // pred_check_branch
      %24 = sbr.rel (0) target = $region25
    $region24: #{tpt_layer_self_attention.1} parent=1 // pred_region
      _
    $region25: #{tpt_layer_self_attention.1} parent=1 // pred_fallthru
      _
    // Predicated region
    $region26: #{tpt_layer_self_attention.1} parent=1 // pred_check
      _
    $region27: #{tpt_layer_self_attention.1} parent=1 // pred_check_branch
      %26 = sbr.rel (0) target = $region29
    $region28: #{tpt_layer_self_attention.1} parent=1 // pred_region
      _
    $region29: #{tpt_layer_self_attention.1} parent=1 // pred_fallthru
      _
    %v27 = vld [vmem:[%s0] sm:$0xff]
    %v28 = vld [vmem:[%s0 + $0x8] sm:$0xff]
    %v29 = vmul.f32 %v27, %v27
    %v30 = vmul.f32 %v28, %v28
    %vm31 = vcmask 261120
    %v32 = vsel %vm31, %v29, 0.0
    %33 = vadd.xlane.f32.xlu0 %v32
    %v34 = vpop.xlane.xlu0 %33
    %v35 = vsel %vm31, %v30, 0.0
    %36 = vadd.xlane.f32.xlu0 %v35
    %v37 = vpop.xlane.xlu0 %36
    %v38 = vrcp.pop 32.0
    %v39 = vmul.f32 %v34, %v38
    %v40 = vmul.f32 %v37, %v38
    %v41 = vadd.f32 %v39, 1e-06
    %v42 = vadd.f32 %v40, 1e-06
    %v43 = vrsqrt.pop %v41
    %v44 = vrsqrt.pop %v42
    %v45 = vmul.f32 %v27, %v43
    %v46 = vmul.f32 %v28, %v44
    %v47 = vld [vmem:[%s1] sm:$0x1]
    %v49 = vlaneseq
    %v50 = vshrl.u32 %v49, 7
    %v51 = vsub.s32 0, %v50
    %v52 = vrot.slane %v47, %v51
    %v54 = vmul.f32 %v45, %v52
    %v55 = vmul.f32 %v46, %v52
    %v56 = vld [vmem:[%s2] sm:$0xff]
    %v57 = vld [vmem:[%s2 + $0x8] sm:$0xff]
    %v58 = vld [vmem:[%s2 + $0x10] sm:$0xff]
    %v59 = vld [vmem:[%s2 + $0x18] sm:$0xff]
    %v60 = vld [vmem:[%s3] sm:$0x1]
    %v62 = vlaneseq
    %v63 = vshrl.u32 %v62, 7
    %v64 = vsub.s32 0, %v63
    %v65 = vrot.slane %v60, %v64
    %v68 = vsel %vm31, %v54, 0
    %v71 = vsel %vm31, %v55, 0
    %73 = vmatprep.subr.mxu0 0.0
    %74 = vmatpush1.msra.mxu0 %v56
    %75 = vmatprep.subr.mxu0 0.0
    %76 = vmatpush1.msra.mxu0 %v57
    %77 = vmatprep.subr.mxu0 0.0
    %78 = vmatpush1.msra.mxu0 %v58
    %79 = vmatprep.subr.mxu0 0.0
    %80 = vmatpush1.msra.mxu0 %v59
    %81 = vmatprep.subr.mxu0 0.0
    %82 = vmatpush1.msra.mxu0 0.0
    %83 = vmatprep.subr.mxu0 0.0
    %84 = vmatpush1.msra.mxu0 0.0
    %85 = vmatprep.subr.mxu0 0.0
    %86 = vmatpush1.msra.mxu0 0.0
    %87 = vmatprep.subr.mxu0 0.0
    %88 = vmatpush1.msra.mxu0 0.0
    %89 = vmatprep.subr.mxu0 0.0
    %90 = vmatpush1.msra.mxu0 0.0
    %91 = vmatprep.subr.mxu0 0.0
    %92 = vmatpush1.msra.mxu0 0.0
    %93 = vmatprep.subr.mxu0 0.0
    %94 = vmatpush1.msra.mxu0 0.0
    %95 = vmatprep.subr.mxu0 0.0
    %96 = vmatpush1.msra.mxu0 0.0
    %97 = vmatprep.subr.mxu0 0.0
    %98 = vmatpush1.msra.mxu0 0.0
    %99 = vmatprep.subr.mxu0 0.0
    %100 = vmatpush1.msra.mxu0 0.0
    %101 = vmatprep.subr.mxu0 0.0
    %102 = vmatpush1.msra.mxu0 0.0
    %103 = vmatprep.subr.mxu0 0.0
    %104 = vmatpush1.msra.mxu0 0.0
    %105 = vmatprep.subr.mxu0 0.0
    %106 = vmatpush1.msra.mxu0 0.0
    %107 = vmatprep.subr.mxu0 0.0
    %108 = vmatpush1.msra.mxu0 0.0
    %109 = vmatprep.subr.mxu0 0.0
    %110 = vmatpush1.msra.mxu0 0.0
    %111 = vmatprep.subr.mxu0 0.0
    %112 = vmatpush1.msra.mxu0 0.0
    %113 = vmatprep.subr.mxu0 0.0
    %114 = vmatpush1.msra.mxu0 0.0
    %115 = vmatprep.subr.mxu0 0.0
    %116 = vmatpush1.msra.mxu0 0.0
    %117 = vmatprep.subr.mxu0 0.0
    %118 = vmatpush1.msra.mxu0 0.0
    %119 = vmatprep.subr.mxu0 0.0
    %120 = vmatpush1.msra.mxu0 0.0
    %121 = vmatprep.subr.mxu0 0.0
    %122 = vmatpush1.msra.mxu0 0.0
    %123 = vmatprep.subr.mxu0 0.0
    %124 = vmatpush1.msra.mxu0 0.0
    %125 = vmatprep.subr.mxu0 0.0
    %126 = vmatpush1.msra.mxu0 0.0
    %127 = vmatprep.subr.mxu0 0.0
    %128 = vmatpush1.msra.mxu0 0.0
    %129 = vmatprep.subr.mxu0 0.0
    %130 = vmatpush1.msra.mxu0 0.0
    %131 = vmatprep.subr.mxu0 0.0
    %132 = vmatpush1.msra.mxu0 0.0
    %133 = vmatprep.subr.mxu0 0.0
    %134 = vmatpush1.msra.mxu0 0.0
    %135 = vmatprep.subr.mxu0 0.0
    %136 = vmatpush1.msra.mxu0 0.0
    %137 = vmatprep.mubr.f32.mxu0 0.0
    %138 = vmatmul.mubr.f32.gmra.mrb[0].mxu0 %v68
    %v139 = vpop.f32.mrb[0].mxu0
    %v140 = vadd.f32 %v65, %v139
    %v141 = vpop.f32.mrb[0].mxu0
    %142 = vmatprep.mubr.f32.mxu0 0.0
    %143 = vmatmul.mubr.f32.gmra.mrb[0].mxu0 %v71
    %v144 = vpop.f32.mrb[0].mxu0
    %v145 = vadd.f32 %v65, %v144
    %v146 = vpop.f32.mrb[0].mxu0
    %147 = vdwg.mxu0
    %148 = vxpose.xlu0.b32.start [1/16] %v140, 128
    %149 = vxpose.xlu0.b32.cont [2/16] %v145, 128
    %150 = vxpose.xlu0.b32.cont [3/16] 0.0, 128
    %151 = vxpose.xlu0.b32.cont [4/16] 0.0, 128
    %152 = vxpose.xlu0.b32.cont [5/16] 0.0, 128
    %153 = vxpose.xlu0.b32.cont [6/16] 0.0, 128
    %154 = vxpose.xlu0.b32.cont [7/16] 0.0, 128
    %155 = vxpose.xlu0.b32.cont [8/16] 0.0, 128
    %156 = vxpose.xlu0.b32.cont [9/16] 0.0, 128
    %157 = vxpose.xlu0.b32.cont [10/16] 0.0, 128
    %158 = vxpose.xlu0.b32.cont [11/16] 0.0, 128
    %159 = vxpose.xlu0.b32.cont [12/16] 0.0, 128
    %160 = vxpose.xlu0.b32.cont [13/16] 0.0, 128
    %161 = vxpose.xlu0.b32.cont [14/16] 0.0, 128
    %162 = vxpose.xlu0.b32.cont [15/16] 0.0, 128
    %163 = vxpose.xlu0.b32.end [16/16] 0.0, 128
    %v164 = vpop.trf.xlu0
    %v165 = vpop.trf.xlu0
    %v166 = vpop.trf.xlu0
    %v167 = vpop.trf.xlu0
    %v168 = vpop.trf.xlu0
    %v169 = vpop.trf.xlu0
    %v170 = vpop.trf.xlu0
    %v171 = vpop.trf.xlu0
    %v172 = vpop.trf.xlu0
    %v173 = vpop.trf.xlu0
    %v174 = vpop.trf.xlu0
    %v175 = vpop.trf.xlu0
    %v176 = vpop.trf.xlu0
    %v177 = vpop.trf.xlu0
    %v178 = vpop.trf.xlu0
    %v179 = vpop.trf.xlu0
    %v180 = vld [vmem:[%s4] sm:$0xff]
    %v181 = vld [vmem:[%s6] sm:$0xff]
    %v182 = vld [vmem:[%s6 + $0x8] sm:$0xff]
    %v183 = vld [vmem:[%s6 + $0x10] sm:$0xff]
    %v184 = vld [vmem:[%s6 + $0x18] sm:$0xff]
    %v185 = vld [vmem:[%s6 + $0x20] sm:$0xff]
    %v186 = vld [vmem:[%s6 + $0x28] sm:$0xff]
    %v187 = vld [vmem:[%s6 + $0x30] sm:$0xff]
    %v188 = vld [vmem:[%s6 + $0x38] sm:$0xff]
    %189 = vxpose.xlu0.b32.start [1/16] %v164, 128
    %190 = vxpose.xlu0.b32.cont [2/16] 0.0, 128
    %191 = vxpose.xlu0.b32.cont [3/16] 0.0, 128
    %192 = vxpose.xlu0.b32.cont [4/16] 0.0, 128
    %193 = vxpose.xlu0.b32.cont [5/16] 0.0, 128
    %194 = vxpose.xlu0.b32.cont [6/16] 0.0, 128
    %195 = vxpose.xlu0.b32.cont [7/16] 0.0, 128
    %196 = vxpose.xlu0.b32.cont [8/16] 0.0, 128
    %197 = vxpose.xlu0.b32.cont [9/16] 0.0, 128
    %198 = vxpose.xlu0.b32.cont [10/16] 0.0, 128
    %199 = vxpose.xlu0.b32.cont [11/16] 0.0, 128
    %200 = vxpose.xlu0.b32.cont [12/16] 0.0, 128
    %201 = vxpose.xlu0.b32.cont [13/16] 0.0, 128
    %202 = vxpose.xlu0.b32.cont [14/16] 0.0, 128
    %203 = vxpose.xlu0.b32.cont [15/16] 0.0, 128
    %204 = vxpose.xlu0.b32.end [16/16] 0.0, 128
    %v205 = vpop.trf.xlu0
    %v206 = vpop.trf.xlu0
    %v207 = vpop.trf.xlu0
    %v208 = vpop.trf.xlu0
    %v209 = vpop.trf.xlu0
    %v210 = vpop.trf.xlu0
    %v211 = vpop.trf.xlu0
    %v212 = vpop.trf.xlu0
    %v213 = vpop.trf.xlu0
    %v214 = vpop.trf.xlu0
    %v215 = vpop.trf.xlu0
    %v216 = vpop.trf.xlu0
    %v217 = vpop.trf.xlu0
    %v218 = vpop.trf.xlu0
    %v219 = vpop.trf.xlu0
    %v220 = vpop.trf.xlu0
    %vm221 = vcmask 64512
    %v223 = vsel %vm221, %v205, 0
    %v226 = vsel %vm221, %v206, 0
    %228 = vmatprep.subr.mxu0 0.0
    %229 = vmatpush1.msra.mxu0 %v168
    %230 = vmatprep.subr.mxu0 0.0
    %231 = vmatpush1.msra.mxu0 0.0
    %232 = vmatprep.subr.mxu0 0.0
    %233 = vmatpush1.msra.mxu0 0.0
    %234 = vmatprep.subr.mxu0 0.0
    %235 = vmatpush1.msra.mxu0 0.0
    %236 = vmatprep.subr.mxu0 0.0
    %237 = vmatpush1.msra.mxu0 0.0
    %238 = vmatprep.subr.mxu0 0.0
    %239 = vmatpush1.msra.mxu0 0.0
    %240 = vmatprep.subr.mxu0 0.0
    %241 = vmatpush1.msra.mxu0 0.0
    %242 = vmatprep.subr.mxu0 0.0
    %243 = vmatpush1.msra.mxu0 0.0
    %244 = vmatprep.subr.mxu0 0.0
    %245 = vmatpush1.msra.mxu0 0.0
    %246 = vmatprep.subr.mxu0 0.0
    %247 = vmatpush1.msra.mxu0 0.0
    %248 = vmatprep.subr.mxu0 0.0
    %249 = vmatpush1.msra.mxu0 0.0
    %250 = vmatprep.subr.mxu0 0.0
    %251 = vmatpush1.msra.mxu0 0.0
    %252 = vmatprep.subr.mxu0 0.0
    %253 = vmatpush1.msra.mxu0 0.0
    %254 = vmatprep.subr.mxu0 0.0
    %255 = vmatpush1.msra.mxu0 0.0
    %256 = vmatprep.subr.mxu0 0.0
    %257 = vmatpush1.msra.mxu0 0.0
    %258 = vmatprep.subr.mxu0 0.0
    %259 = vmatpush1.msra.mxu0 0.0
    %260 = vmatprep.subr.mxu0 0.0
    %261 = vmatpush1.msra.mxu0 0.0
    %262 = vmatprep.subr.mxu0 0.0
    %263 = vmatpush1.msra.mxu0 0.0
    %264 = vmatprep.subr.mxu0 0.0
    %265 = vmatpush1.msra.mxu0 0.0
    %266 = vmatprep.subr.mxu0 0.0
    %267 = vmatpush1.msra.mxu0 0.0
    %268 = vmatprep.subr.mxu0 0.0
    %269 = vmatpush1.msra.mxu0 0.0
    %270 = vmatprep.subr.mxu0 0.0
    %271 = vmatpush1.msra.mxu0 0.0
    %272 = vmatprep.subr.mxu0 0.0
    %273 = vmatpush1.msra.mxu0 0.0
    %274 = vmatprep.subr.mxu0 0.0
    %275 = vmatpush1.msra.mxu0 0.0
    %276 = vmatprep.subr.mxu0 0.0
    %277 = vmatpush1.msra.mxu0 0.0
    %278 = vmatprep.subr.mxu0 0.0
    %279 = vmatpush1.msra.mxu0 0.0
    %280 = vmatprep.subr.mxu0 0.0
    %281 = vmatpush1.msra.mxu0 0.0
    %282 = vmatprep.subr.mxu0 0.0
    %283 = vmatpush1.msra.mxu0 0.0
    %284 = vmatprep.subr.mxu0 0.0
    %285 = vmatpush1.msra.mxu0 0.0
    %286 = vmatprep.subr.mxu0 0.0
    %287 = vmatpush1.msra.mxu0 0.0
    %288 = vmatprep.subr.mxu0 0.0
    %289 = vmatpush1.msra.mxu0 0.0
    %290 = vmatprep.subr.mxu0 0.0
    %291 = vmatpush1.msra.mxu0 0.0
    %292 = vmatprep.mubr.f32.mxu0 0.0
    %293 = vmatmul.mubr.f32.gmra.mrb[0].mxu0 %v223
    %v294 = vpop.f32.mrb[0].mxu0
    %v295 = vadd.f32 %v181, %v294
    %v296 = vpop.f32.mrb[0].mxu0
    %297 = vmatprep.mubr.f32.mxu0 0.0
    %298 = vmatmul.mubr.f32.gmra.mrb[0].mxu0 %v226
    %v299 = vpop.f32.mrb[0].mxu0
    %v300 = vadd.f32 %v182, %v299
    %v301 = vpop.f32.mrb[0].mxu0
    %302 = vdwg.mxu0
    %vm303 = vcmask 130048
    %v304 = vsel %vm303, %v295, -inf
    %305 = vmax.xlane.f32.xlu0 %v304
    %v306 = vpop.xlane.xlu0 %305
    %v307 = vsel %vm303, %v300, -inf
    %308 = vmax.xlane.f32.xlu0 %v307
    %v309 = vpop.xlane.xlu0 %308
    %v310 = vsub.f32 %v295, %v306
    %v311 = vsub.f32 %v300, %v309
    %v312 = vmul.f32 %v310, 1.442695
    %v313 = vpow.pop %v312
    %v314 = vmul.f32 %v311, 1.442695
    %v315 = vpow.pop %v314
    %v316 = vsel %vm303, %v313, 0.0
    %317 = vadd.xlane.f32.xlu0 %v316
    %v318 = vpop.xlane.xlu0 %317
    %v319 = vsel %vm303, %v315, 0.0
    %320 = vadd.xlane.f32.xlu0 %v319
    %v321 = vpop.xlane.xlu0 %320
    %v322 = vrcp.pop %v318
    %v323 = vrcp.pop %v321
    %v324 = vmul.f32 %v313, %v322
    %v325 = vmul.f32 %v315, %v323
    %v327 = vsel %vm303, %v172, 0
    %v330 = vsel %vm303, %v324, 0
    %v333 = vsel %vm303, %v325, 0
    %335 = vmatprep.subr.mxu0 0.0
    %336 = vmatpush1.xpose.msra.mxu0 %v330
    %337 = vmatprep.subr.mxu0 0.0
    %338 = vmatpush1.xpose.msra.mxu0 %v333
    %339 = vmatprep.subr.mxu0 0.0
    %340 = vmatpush1.xpose.msra.mxu0 0.0
    %341 = vmatprep.subr.mxu0 0.0
    %342 = vmatpush1.xpose.msra.mxu0 0.0
    %343 = vmatprep.subr.mxu0 0.0
    %344 = vmatpush1.xpose.msra.mxu0 0.0
    %345 = vmatprep.subr.mxu0 0.0
    %346 = vmatpush1.xpose.msra.mxu0 0.0
    %347 = vmatprep.subr.mxu0 0.0
    %348 = vmatpush1.xpose.msra.mxu0 0.0
    %349 = vmatprep.subr.mxu0 0.0
    %350 = vmatpush1.xpose.msra.mxu0 0.0
    %351 = vmatprep.subr.mxu0 0.0
    %352 = vmatpush1.xpose.msra.mxu0 0.0
    %353 = vmatprep.subr.mxu0 0.0
    %354 = vmatpush1.xpose.msra.mxu0 0.0
    %355 = vmatprep.subr.mxu0 0.0
    %356 = vmatpush1.xpose.msra.mxu0 0.0
    %357 = vmatprep.subr.mxu0 0.0
    %358 = vmatpush1.xpose.msra.mxu0 0.0
    %359 = vmatprep.subr.mxu0 0.0
    %360 = vmatpush1.xpose.msra.mxu0 0.0
    %361 = vmatprep.subr.mxu0 0.0
    %362 = vmatpush1.xpose.msra.mxu0 0.0
    %363 = vmatprep.subr.mxu0 0.0
    %364 = vmatpush1.xpose.msra.mxu0 0.0
    %365 = vmatprep.subr.mxu0 0.0
    %366 = vmatpush1.xpose.msra.mxu0 0.0
    %367 = vmatprep.subr.mxu0 0.0
    %368 = vmatpush1.xpose.msra.mxu0 0.0
    %369 = vmatprep.subr.mxu0 0.0
    %370 = vmatpush1.xpose.msra.mxu0 0.0
    %371 = vmatprep.subr.mxu0 0.0
    %372 = vmatpush1.xpose.msra.mxu0 0.0
    %373 = vmatprep.subr.mxu0 0.0
    %374 = vmatpush1.xpose.msra.mxu0 0.0
    %375 = vmatprep.subr.mxu0 0.0
    %376 = vmatpush1.xpose.msra.mxu0 0.0
    %377 = vmatprep.subr.mxu0 0.0
    %378 = vmatpush1.xpose.msra.mxu0 0.0
    %379 = vmatprep.subr.mxu0 0.0
    %380 = vmatpush1.xpose.msra.mxu0 0.0
    %381 = vmatprep.subr.mxu0 0.0
    %382 = vmatpush1.xpose.msra.mxu0 0.0
    %383 = vmatprep.subr.mxu0 0.0
    %384 = vmatpush1.xpose.msra.mxu0 0.0
    %385 = vmatprep.subr.mxu0 0.0
    %386 = vmatpush1.xpose.msra.mxu0 0.0
    %387 = vmatprep.subr.mxu0 0.0
    %388 = vmatpush1.xpose.msra.mxu0 0.0
    %389 = vmatprep.subr.mxu0 0.0
    %390 = vmatpush1.xpose.msra.mxu0 0.0
    %391 = vmatprep.subr.mxu0 0.0
    %392 = vmatpush1.xpose.msra.mxu0 0.0
    %393 = vmatprep.subr.mxu0 0.0
    %394 = vmatpush1.xpose.msra.mxu0 0.0
    %395 = vmatprep.subr.mxu0 0.0
    %396 = vmatpush1.xpose.msra.mxu0 0.0
    %397 = vmatprep.subr.mxu0 0.0
    %398 = vmatpush1.xpose.msra.mxu0 0.0
    %399 = vmatprep.mubr.f32.mxu0 0.0
    %400 = vmatmul.mubr.f32.gmra.mrb[0].mxu0 %v327
    %v401 = vpop.f32.mrb[0].mxu0
    %v402 = vadd.f32 0.0, %v401
    %v403 = vpop.f32.mrb[0].mxu0
    %404 = vdwg.mxu0
    %v405 = vsel %vm303, %v176, -inf
    %v406 = vrot.slane %v405, 4
    %v407 = vmax.f32 %v405, %v406
    %v408 = vrot.slane %v407, 2
    %v409 = vmax.f32 %v407, %v408
    %v410 = vrot.slane %v409, 1
    %v411 = vmax.f32 %v409, %v410
    %v412 = vsub.f32 %v176, %v411
    %v413 = vmul.f32 %v412, 1.442695
    %v414 = vpow.pop %v413
    %v415 = vsel %vm303, %v414, 0.0
    %v416 = vrot.slane %v415, 4
    %v417 = vadd.f32 %v415, %v416
    %v418 = vrot.slane %v417, 2
    %v419 = vadd.f32 %v417, %v418
    %v420 = vrot.slane %v419, 1
    %v421 = vadd.f32 %v419, %v420
    %v422 = vrcp.pop %v421
    %v423 = vmul.f32 %v414, %v422
    %v425 = vsel %vm221, %v180, 0
    %427 = vmatprep.subr.mxu0 0.0
    %428 = vmatpush1.msra.mxu0 %v423
    %429 = vmatprep.subr.mxu0 0.0
    %430 = vmatpush1.msra.mxu0 0.0
    %431 = vmatprep.subr.mxu0 0.0
    %432 = vmatpush1.msra.mxu0 0.0
    %433 = vmatprep.subr.mxu0 0.0
    %434 = vmatpush1.msra.mxu0 0.0
    %435 = vmatprep.subr.mxu0 0.0
    %436 = vmatpush1.msra.mxu0 0.0
    %437 = vmatprep.subr.mxu0 0.0
    %438 = vmatpush1.msra.mxu0 0.0
    %439 = vmatprep.subr.mxu0 0.0
    %440 = vmatpush1.msra.mxu0 0.0
    %441 = vmatprep.subr.mxu0 0.0
    %442 = vmatpush1.msra.mxu0 0.0
    %443 = vmatprep.subr.mxu0 0.0
    %444 = vmatpush1.msra.mxu0 0.0
    %445 = vmatprep.subr.mxu0 0.0
    %446 = vmatpush1.msra.mxu0 0.0
    %447 = vmatprep.subr.mxu0 0.0
    %448 = vmatpush1.msra.mxu0 0.0
    %449 = vmatprep.subr.mxu0 0.0
    %450 = vmatpush1.msra.mxu0 0.0
    %451 = vmatprep.subr.mxu0 0.0
    %452 = vmatpush1.msra.mxu0 0.0
    %453 = vmatprep.subr.mxu0 0.0
    %454 = vmatpush1.msra.mxu0 0.0
    %455 = vmatprep.subr.mxu0 0.0
    %456 = vmatpush1.msra.mxu0 0.0
    %457 = vmatprep.subr.mxu0 0.0
    %458 = vmatpush1.msra.mxu0 0.0
    %459 = vmatprep.subr.mxu0 0.0
    %460 = vmatpush1.msra.mxu0 0.0
    %461 = vmatprep.subr.mxu0 0.0
    %462 = vmatpush1.msra.mxu0 0.0
    %463 = vmatprep.subr.mxu0 0.0
    %464 = vmatpush1.msra.mxu0 0.0
    %465 = vmatprep.subr.mxu0 0.0
    %466 = vmatpush1.msra.mxu0 0.0
    %467 = vmatprep.subr.mxu0 0.0
    %468 = vmatpush1.msra.mxu0 0.0
    %469 = vmatprep.subr.mxu0 0.0
    %470 = vmatpush1.msra.mxu0 0.0
    %471 = vmatprep.subr.mxu0 0.0
    %472 = vmatpush1.msra.mxu0 0.0
    %473 = vmatprep.subr.mxu0 0.0
    %474 = vmatpush1.msra.mxu0 0.0
    %475 = vmatprep.subr.mxu0 0.0
    %476 = vmatpush1.msra.mxu0 0.0
    %477 = vmatprep.subr.mxu0 0.0
    %478 = vmatpush1.msra.mxu0 0.0
    %479 = vmatprep.subr.mxu0 0.0
    %480 = vmatpush1.msra.mxu0 0.0
    %481 = vmatprep.subr.mxu0 0.0
    %482 = vmatpush1.msra.mxu0 0.0
    %483 = vmatprep.subr.mxu0 0.0
    %484 = vmatpush1.msra.mxu0 0.0
    %485 = vmatprep.subr.mxu0 0.0
    %486 = vmatpush1.msra.mxu0 0.0
    %487 = vmatprep.subr.mxu0 0.0
    %488 = vmatpush1.msra.mxu0 0.0
    %489 = vmatprep.subr.mxu0 0.0
    %490 = vmatpush1.msra.mxu0 0.0
    %491 = vmatprep.mubr.f32.mxu0 0.0
    %492 = vmatmul.mubr.f32.gmra.mrb[0].mxu0 %v425
    %v493 = vpop.f32.mrb[0].mxu0
    %v494 = vadd.f32 1.0, %v493
    %v495 = vpop.f32.mrb[0].mxu0
    %496 = vdwg.mxu0
    %v497 = vmul.f32 %v402, %v494
    %498 = vxpose.xlu0.b32.start [1/16] %v165, 128
    %499 = vxpose.xlu0.b32.cont [2/16] 0.0, 128
    %500 = vxpose.xlu0.b32.cont [3/16] 0.0, 128
    %501 = vxpose.xlu0.b32.cont [4/16] 0.0, 128
    %502 = vxpose.xlu0.b32.cont [5/16] 0.0, 128
    %503 = vxpose.xlu0.b32.cont [6/16] 0.0, 128
    %504 = vxpose.xlu0.b32.cont [7/16] 0.0, 128
    %505 = vxpose.xlu0.b32.cont [8/16] 0.0, 128
    %506 = vxpose.xlu0.b32.cont [9/16] 0.0, 128
    %507 = vxpose.xlu0.b32.cont [10/16] 0.0, 128
    %508 = vxpose.xlu0.b32.cont [11/16] 0.0, 128
    %509 = vxpose.xlu0.b32.cont [12/16] 0.0, 128
    %510 = vxpose.xlu0.b32.cont [13/16] 0.0, 128
    %511 = vxpose.xlu0.b32.cont [14/16] 0.0, 128
    %512 = vxpose.xlu0.b32.cont [15/16] 0.0, 128
    %513 = vxpose.xlu0.b32.end [16/16] 0.0, 128
    %v514 = vpop.trf.xlu0
    %v515 = vpop.trf.xlu0
    %v516 = vpop.trf.xlu0
    %v517 = vpop.trf.xlu0
    %v518 = vpop.trf.xlu0
    %v519 = vpop.trf.xlu0
    %v520 = vpop.trf.xlu0
    %v521 = vpop.trf.xlu0
    %v522 = vpop.trf.xlu0
    %v523 = vpop.trf.xlu0
    %v524 = vpop.trf.xlu0
    %v525 = vpop.trf.xlu0
    %v526 = vpop.trf.xlu0
    %v527 = vpop.trf.xlu0
    %v528 = vpop.trf.xlu0
    %v529 = vpop.trf.xlu0
    %v531 = vsel %vm221, %v514, 0
    %v534 = vsel %vm221, %v515, 0
    %536 = vmatprep.subr.mxu0 0.0
    %537 = vmatpush1.msra.mxu0 %v169
    %538 = vmatprep.subr.mxu0 0.0
    %539 = vmatpush1.msra.mxu0 0.0
    %540 = vmatprep.subr.mxu0 0.0
    %541 = vmatpush1.msra.mxu0 0.0
    %542 = vmatprep.subr.mxu0 0.0
    %543 = vmatpush1.msra.mxu0 0.0
    %544 = vmatprep.subr.mxu0 0.0
    %545 = vmatpush1.msra.mxu0 0.0
    %546 = vmatprep.subr.mxu0 0.0
    %547 = vmatpush1.msra.mxu0 0.0
    %548 = vmatprep.subr.mxu0 0.0
    %549 = vmatpush1.msra.mxu0 0.0
    %550 = vmatprep.subr.mxu0 0.0
    %551 = vmatpush1.msra.mxu0 0.0
    %552 = vmatprep.subr.mxu0 0.0
    %553 = vmatpush1.msra.mxu0 0.0
    %554 = vmatprep.subr.mxu0 0.0
    %555 = vmatpush1.msra.mxu0 0.0
    %556 = vmatprep.subr.mxu0 0.0
    %557 = vmatpush1.msra.mxu0 0.0
    %558 = vmatprep.subr.mxu0 0.0
    %559 = vmatpush1.msra.mxu0 0.0
    %560 = vmatprep.subr.mxu0 0.0
    %561 = vmatpush1.msra.mxu0 0.0
    %562 = vmatprep.subr.mxu0 0.0
    %563 = vmatpush1.msra.mxu0 0.0
    %564 = vmatprep.subr.mxu0 0.0
    %565 = vmatpush1.msra.mxu0 0.0
    %566 = vmatprep.subr.mxu0 0.0
    %567 = vmatpush1.msra.mxu0 0.0
    %568 = vmatprep.subr.mxu0 0.0
    %569 = vmatpush1.msra.mxu0 0.0
    %570 = vmatprep.subr.mxu0 0.0
    %571 = vmatpush1.msra.mxu0 0.0
    %572 = vmatprep.subr.mxu0 0.0
    %573 = vmatpush1.msra.mxu0 0.0
    %574 = vmatprep.subr.mxu0 0.0
    %575 = vmatpush1.msra.mxu0 0.0
    %576 = vmatprep.subr.mxu0 0.0
    %577 = vmatpush1.msra.mxu0 0.0
    %578 = vmatprep.subr.mxu0 0.0
    %579 = vmatpush1.msra.mxu0 0.0
    %580 = vmatprep.subr.mxu0 0.0
    %581 = vmatpush1.msra.mxu0 0.0
    %582 = vmatprep.subr.mxu0 0.0
    %583 = vmatpush1.msra.mxu0 0.0
    %584 = vmatprep.subr.mxu0 0.0
    %585 = vmatpush1.msra.mxu0 0.0
    %586 = vmatprep.subr.mxu0 0.0
    %587 = vmatpush1.msra.mxu0 0.0
    %588 = vmatprep.subr.mxu0 0.0
    %589 = vmatpush1.msra.mxu0 0.0
    %590 = vmatprep.subr.mxu0 0.0
    %591 = vmatpush1.msra.mxu0 0.0
    %592 = vmatprep.subr.mxu0 0.0
    %593 = vmatpush1.msra.mxu0 0.0
    %594 = vmatprep.subr.mxu0 0.0
    %595 = vmatpush1.msra.mxu0 0.0
    %596 = vmatprep.subr.mxu0 0.0
    %597 = vmatpush1.msra.mxu0 0.0
    %598 = vmatprep.subr.mxu0 0.0
    %599 = vmatpush1.msra.mxu0 0.0
    %600 = vmatprep.mubr.f32.mxu0 0.0
    %601 = vmatmul.mubr.f32.gmra.mrb[0].mxu0 %v531
    %v602 = vpop.f32.mrb[0].mxu0
    %v603 = vadd.f32 %v183, %v602
    %v604 = vpop.f32.mrb[0].mxu0
    %605 = vmatprep.mubr.f32.mxu0 0.0
    %606 = vmatmul.mubr.f32.gmra.mrb[0].mxu0 %v534
    %v607 = vpop.f32.mrb[0].mxu0
    %v608 = vadd.f32 %v184, %v607
    %v609 = vpop.f32.mrb[0].mxu0
    %610 = vdwg.mxu0
    %v611 = vsel %vm303, %v603, -inf
    %612 = vmax.xlane.f32.xlu0 %v611
    %v613 = vpop.xlane.xlu0 %612
    %v614 = vsel %vm303, %v608, -inf
    %615 = vmax.xlane.f32.xlu0 %v614
    %v616 = vpop.xlane.xlu0 %615
    %v617 = vsub.f32 %v603, %v613
    %v618 = vsub.f32 %v608, %v616
    %v619 = vmul.f32 %v617, 1.442695
    %v620 = vpow.pop %v619
    %v621 = vmul.f32 %v618, 1.442695
    %v622 = vpow.pop %v621
    %v623 = vsel %vm303, %v620, 0.0
    %624 = vadd.xlane.f32.xlu0 %v623
    %v625 = vpop.xlane.xlu0 %624
    %v626 = vsel %vm303, %v622, 0.0
    %627 = vadd.xlane.f32.xlu0 %v626
    %v628 = vpop.xlane.xlu0 %627
    %v629 = vrcp.pop %v625
    %v630 = vrcp.pop %v628
    %v631 = vmul.f32 %v620, %v629
    %v632 = vmul.f32 %v622, %v630
    %v634 = vsel %vm303, %v173, 0
    %v637 = vsel %vm303, %v631, 0
    %v640 = vsel %vm303, %v632, 0
    %642 = vmatprep.subr.mxu0 0.0
    %643 = vmatpush1.xpose.msra.mxu0 %v637
    %644 = vmatprep.subr.mxu0 0.0
    %645 = vmatpush1.xpose.msra.mxu0 %v640
    %646 = vmatprep.subr.mxu0 0.0
    %647 = vmatpush1.xpose.msra.mxu0 0.0
    %648 = vmatprep.subr.mxu0 0.0
    %649 = vmatpush1.xpose.msra.mxu0 0.0
    %650 = vmatprep.subr.mxu0 0.0
    %651 = vmatpush1.xpose.msra.mxu0 0.0
    %652 = vmatprep.subr.mxu0 0.0
    %653 = vmatpush1.xpose.msra.mxu0 0.0
    %654 = vmatprep.subr.mxu0 0.0
    %655 = vmatpush1.xpose.msra.mxu0 0.0
    %656 = vmatprep.subr.mxu0 0.0
    %657 = vmatpush1.xpose.msra.mxu0 0.0
    %658 = vmatprep.subr.mxu0 0.0
    %659 = vmatpush1.xpose.msra.mxu0 0.0
    %660 = vmatprep.subr.mxu0 0.0
    %661 = vmatpush1.xpose.msra.mxu0 0.0
    %662 = vmatprep.subr.mxu0 0.0
    %663 = vmatpush1.xpose.msra.mxu0 0.0
    %664 = vmatprep.subr.mxu0 0.0
    %665 = vmatpush1.xpose.msra.mxu0 0.0
    %666 = vmatprep.subr.mxu0 0.0
    %667 = vmatpush1.xpose.msra.mxu0 0.0
    %668 = vmatprep.subr.mxu0 0.0
    %669 = vmatpush1.xpose.msra.mxu0 0.0
    %670 = vmatprep.subr.mxu0 0.0
    %671 = vmatpush1.xpose.msra.mxu0 0.0
    %672 = vmatprep.subr.mxu0 0.0
    %673 = vmatpush1.xpose.msra.mxu0 0.0
    %674 = vmatprep.subr.mxu0 0.0
    %675 = vmatpush1.xpose.msra.mxu0 0.0
    %676 = vmatprep.subr.mxu0 0.0
    %677 = vmatpush1.xpose.msra.mxu0 0.0
    %678 = vmatprep.subr.mxu0 0.0
    %679 = vmatpush1.xpose.msra.mxu0 0.0
    %680 = vmatprep.subr.mxu0 0.0
    %681 = vmatpush1.xpose.msra.mxu0 0.0
    %682 = vmatprep.subr.mxu0 0.0
    %683 = vmatpush1.xpose.msra.mxu0 0.0
    %684 = vmatprep.subr.mxu0 0.0
    %685 = vmatpush1.xpose.msra.mxu0 0.0
    %686 = vmatprep.subr.mxu0 0.0
    %687 = vmatpush1.xpose.msra.mxu0 0.0
    %688 = vmatprep.subr.mxu0 0.0
    %689 = vmatpush1.xpose.msra.mxu0 0.0
    %690 = vmatprep.subr.mxu0 0.0
    %691 = vmatpush1.xpose.msra.mxu0 0.0
    %692 = vmatprep.subr.mxu0 0.0
    %693 = vmatpush1.xpose.msra.mxu0 0.0
    %694 = vmatprep.subr.mxu0 0.0
    %695 = vmatpush1.xpose.msra.mxu0 0.0
    %696 = vmatprep.subr.mxu0 0.0
    %697 = vmatpush1.xpose.msra.mxu0 0.0
    %698 = vmatprep.subr.mxu0 0.0
    %699 = vmatpush1.xpose.msra.mxu0 0.0
    %700 = vmatprep.subr.mxu0 0.0
    %701 = vmatpush1.xpose.msra.mxu0 0.0
    %702 = vmatprep.subr.mxu0 0.0
    %703 = vmatpush1.xpose.msra.mxu0 0.0
    %704 = vmatprep.subr.mxu0 0.0
    %705 = vmatpush1.xpose.msra.mxu0 0.0
    %706 = vmatprep.mubr.f32.mxu0 0.0
    %707 = vmatmul.mubr.f32.gmra.mrb[0].mxu0 %v634
    %v708 = vpop.f32.mrb[0].mxu0
    %v709 = vadd.f32 0.0, %v708
    %v710 = vpop.f32.mrb[0].mxu0
    %711 = vdwg.mxu0
    %v712 = vsel %vm303, %v177, -inf
    %v713 = vrot.slane %v712, 4
    %v714 = vmax.f32 %v712, %v713
    %v715 = vrot.slane %v714, 2
    %v716 = vmax.f32 %v714, %v715
    %v717 = vrot.slane %v716, 1
    %v718 = vmax.f32 %v716, %v717
    %v719 = vsub.f32 %v177, %v718
    %v720 = vmul.f32 %v719, 1.442695
    %v721 = vpow.pop %v720
    %v722 = vsel %vm303, %v721, 0.0
    %v723 = vrot.slane %v722, 4
    %v724 = vadd.f32 %v722, %v723
    %v725 = vrot.slane %v724, 2
    %v726 = vadd.f32 %v724, %v725
    %v727 = vrot.slane %v726, 1
    %v728 = vadd.f32 %v726, %v727
    %v729 = vrcp.pop %v728
    %v730 = vmul.f32 %v721, %v729
    %731 = vmatprep.subr.mxu0 0.0
    %732 = vmatpush1.msra.mxu0 %v730
    %733 = vmatprep.subr.mxu0 0.0
    %734 = vmatpush1.msra.mxu0 0.0
    %735 = vmatprep.subr.mxu0 0.0
    %736 = vmatpush1.msra.mxu0 0.0
    %737 = vmatprep.subr.mxu0 0.0
    %738 = vmatpush1.msra.mxu0 0.0
    %739 = vmatprep.subr.mxu0 0.0
    %740 = vmatpush1.msra.mxu0 0.0
    %741 = vmatprep.subr.mxu0 0.0
    %742 = vmatpush1.msra.mxu0 0.0
    %743 = vmatprep.subr.mxu0 0.0
    %744 = vmatpush1.msra.mxu0 0.0
    %745 = vmatprep.subr.mxu0 0.0
    %746 = vmatpush1.msra.mxu0 0.0
    %747 = vmatprep.subr.mxu0 0.0
    %748 = vmatpush1.msra.mxu0 0.0
    %749 = vmatprep.subr.mxu0 0.0
    %750 = vmatpush1.msra.mxu0 0.0
    %751 = vmatprep.subr.mxu0 0.0
    %752 = vmatpush1.msra.mxu0 0.0
    %753 = vmatprep.subr.mxu0 0.0
    %754 = vmatpush1.msra.mxu0 0.0
    %755 = vmatprep.subr.mxu0 0.0
    %756 = vmatpush1.msra.mxu0 0.0
    %757 = vmatprep.subr.mxu0 0.0
    %758 = vmatpush1.msra.mxu0 0.0
    %759 = vmatprep.subr.mxu0 0.0
    %760 = vmatpush1.msra.mxu0 0.0
    %761 = vmatprep.subr.mxu0 0.0
    %762 = vmatpush1.msra.mxu0 0.0
    %763 = vmatprep.subr.mxu0 0.0
    %764 = vmatpush1.msra.mxu0 0.0
    %765 = vmatprep.subr.mxu0 0.0
    %766 = vmatpush1.msra.mxu0 0.0
    %767 = vmatprep.subr.mxu0 0.0
    %768 = vmatpush1.msra.mxu0 0.0
    %769 = vmatprep.subr.mxu0 0.0
    %770 = vmatpush1.msra.mxu0 0.0
    %771 = vmatprep.subr.mxu0 0.0
    %772 = vmatpush1.msra.mxu0 0.0
    %773 = vmatprep.subr.mxu0 0.0
    %774 = vmatpush1.msra.mxu0 0.0
    %775 = vmatprep.subr.mxu0 0.0
    %776 = vmatpush1.msra.mxu0 0.0
    %777 = vmatprep.subr.mxu0 0.0
    %778 = vmatpush1.msra.mxu0 0.0
    %779 = vmatprep.subr.mxu0 0.0
    %780 = vmatpush1.msra.mxu0 0.0
    %781 = vmatprep.subr.mxu0 0.0
    %782 = vmatpush1.msra.mxu0 0.0
    %783 = vmatprep.subr.mxu0 0.0
    %784 = vmatpush1.msra.mxu0 0.0
    %785 = vmatprep.subr.mxu0 0.0
    %786 = vmatpush1.msra.mxu0 0.0
    %787 = vmatprep.subr.mxu0 0.0
    %788 = vmatpush1.msra.mxu0 0.0
    %789 = vmatprep.subr.mxu0 0.0
    %790 = vmatpush1.msra.mxu0 0.0
    %791 = vmatprep.subr.mxu0 0.0
    %792 = vmatpush1.msra.mxu0 0.0
    %793 = vmatprep.subr.mxu0 0.0
    %794 = vmatpush1.msra.mxu0 0.0
    %795 = vmatprep.mubr.f32.mxu0 0.0
    %796 = vmatmul.mubr.f32.gmra.mrb[0].mxu0 %v425
    %v797 = vpop.f32.mrb[0].mxu0
    %v798 = vadd.f32 1.0, %v797
    %v799 = vpop.f32.mrb[0].mxu0
    %800 = vdwg.mxu0
    %v801 = vmul.f32 %v709, %v798
    %802 = vxpose.xlu0.b32.start [1/16] %v166, 128
    %803 = vxpose.xlu0.b32.cont [2/16] 0.0, 128
    %804 = vxpose.xlu0.b32.cont [3/16] 0.0, 128
    %805 = vxpose.xlu0.b32.cont [4/16] 0.0, 128
    %806 = vxpose.xlu0.b32.cont [5/16] 0.0, 128
    %807 = vxpose.xlu0.b32.cont [6/16] 0.0, 128
    %808 = vxpose.xlu0.b32.cont [7/16] 0.0, 128
    %809 = vxpose.xlu0.b32.cont [8/16] 0.0, 128
    %810 = vxpose.xlu0.b32.cont [9/16] 0.0, 128
    %811 = vxpose.xlu0.b32.cont [10/16] 0.0, 128
    %812 = vxpose.xlu0.b32.cont [11/16] 0.0, 128
    %813 = vxpose.xlu0.b32.cont [12/16] 0.0, 128
    %814 = vxpose.xlu0.b32.cont [13/16] 0.0, 128
    %815 = vxpose.xlu0.b32.cont [14/16] 0.0, 128
    %816 = vxpose.xlu0.b32.cont [15/16] 0.0, 128
    %817 = vxpose.xlu0.b32.end [16/16] 0.0, 128
    %v818 = vpop.trf.xlu0
    %v819 = vpop.trf.xlu0
    %v820 = vpop.trf.xlu0
    %v821 = vpop.trf.xlu0
    %v822 = vpop.trf.xlu0
    %v823 = vpop.trf.xlu0
    %v824 = vpop.trf.xlu0
    %v825 = vpop.trf.xlu0
    %v826 = vpop.trf.xlu0
    %v827 = vpop.trf.xlu0
    %v828 = vpop.trf.xlu0
    %v829 = vpop.trf.xlu0
    %v830 = vpop.trf.xlu0
    %v831 = vpop.trf.xlu0
    %v832 = vpop.trf.xlu0
    %v833 = vpop.trf.xlu0
    %v835 = vsel %vm221, %v818, 0
    %v838 = vsel %vm221, %v819, 0
    %840 = vmatprep.subr.mxu0 0.0
    %841 = vmatpush1.msra.mxu0 %v170
    %842 = vmatprep.subr.mxu0 0.0
    %843 = vmatpush1.msra.mxu0 0.0
    %844 = vmatprep.subr.mxu0 0.0
    %845 = vmatpush1.msra.mxu0 0.0
    %846 = vmatprep.subr.mxu0 0.0
    %847 = vmatpush1.msra.mxu0 0.0
    %848 = vmatprep.subr.mxu0 0.0
    %849 = vmatpush1.msra.mxu0 0.0
    %850 = vmatprep.subr.mxu0 0.0
    %851 = vmatpush1.msra.mxu0 0.0
    %852 = vmatprep.subr.mxu0 0.0
    %853 = vmatpush1.msra.mxu0 0.0
    %854 = vmatprep.subr.mxu0 0.0
    %855 = vmatpush1.msra.mxu0 0.0
    %856 = vmatprep.subr.mxu0 0.0
    %857 = vmatpush1.msra.mxu0 0.0
    %858 = vmatprep.subr.mxu0 0.0
    %859 = vmatpush1.msra.mxu0 0.0
    %860 = vmatprep.subr.mxu0 0.0
    %861 = vmatpush1.msra.mxu0 0.0
    %862 = vmatprep.subr.mxu0 0.0
    %863 = vmatpush1.msra.mxu0 0.0
    %864 = vmatprep.subr.mxu0 0.0
    %865 = vmatpush1.msra.mxu0 0.0
    %866 = vmatprep.subr.mxu0 0.0
    %867 = vmatpush1.msra.mxu0 0.0
    %868 = vmatprep.subr.mxu0 0.0
    %869 = vmatpush1.msra.mxu0 0.0
    %870 = vmatprep.subr.mxu0 0.0
    %871 = vmatpush1.msra.mxu0 0.0
    %872 = vmatprep.subr.mxu0 0.0
    %873 = vmatpush1.msra.mxu0 0.0
    %874 = vmatprep.subr.mxu0 0.0
    %875 = vmatpush1.msra.mxu0 0.0
    %876 = vmatprep.subr.mxu0 0.0
    %877 = vmatpush1.msra.mxu0 0.0
    %878 = vmatprep.subr.mxu0 0.0
    %879 = vmatpush1.msra.mxu0 0.0
    %880 = vmatprep.subr.mxu0 0.0
    %881 = vmatpush1.msra.mxu0 0.0
    %882 = vmatprep.subr.mxu0 0.0
    %883 = vmatpush1.msra.mxu0 0.0
    %884 = vmatprep.subr.mxu0 0.0
    %885 = vmatpush1.msra.mxu0 0.0
    %886 = vmatprep.subr.mxu0 0.0
    %887 = vmatpush1.msra.mxu0 0.0
    %888 = vmatprep.subr.mxu0 0.0
    %889 = vmatpush1.msra.mxu0 0.0
    %890 = vmatprep.subr.mxu0 0.0
    %891 = vmatpush1.msra.mxu0 0.0
    %892 = vmatprep.subr.mxu0 0.0
    %893 = vmatpush1.msra.mxu0 0.0
    %894 = vmatprep.subr.mxu0 0.0
    %895 = vmatpush1.msra.mxu0 0.0
    %896 = vmatprep.subr.mxu0 0.0
    %897 = vmatpush1.msra.mxu0 0.0
    %898 = vmatprep.subr.mxu0 0.0
    %899 = vmatpush1.msra.mxu0 0.0
    %900 = vmatprep.subr.mxu0 0.0
    %901 = vmatpush1.msra.mxu0 0.0
    %902 = vmatprep.subr.mxu0 0.0
    %903 = vmatpush1.msra.mxu0 0.0
    %904 = vmatprep.mubr.f32.mxu0 0.0
    %905 = vmatmul.mubr.f32.gmra.mrb[0].mxu0 %v835
    %v906 = vpop.f32.mrb[0].mxu0
    %v907 = vadd.f32 %v185, %v906
    %v908 = vpop.f32.mrb[0].mxu0
    %909 = vmatprep.mubr.f32.mxu0 0.0
    %910 = vmatmul.mubr.f32.gmra.mrb[0].mxu0 %v838
    %v911 = vpop.f32.mrb[0].mxu0
    %v912 = vadd.f32 %v186, %v911
    %v913 = vpop.f32.mrb[0].mxu0
    %914 = vdwg.mxu0
    %v915 = vsel %vm303, %v907, -inf
    %916 = vmax.xlane.f32.xlu0 %v915
    %v917 = vpop.xlane.xlu0 %916
    %v918 = vsel %vm303, %v912, -inf
    %919 = vmax.xlane.f32.xlu0 %v918
    %v920 = vpop.xlane.xlu0 %919
    %v921 = vsub.f32 %v907, %v917
    %v922 = vsub.f32 %v912, %v920
    %v923 = vmul.f32 %v921, 1.442695
    %v924 = vpow.pop %v923
    %v925 = vmul.f32 %v922, 1.442695
    %v926 = vpow.pop %v925
    %v927 = vsel %vm303, %v924, 0.0
    %928 = vadd.xlane.f32.xlu0 %v927
    %v929 = vpop.xlane.xlu0 %928
    %v930 = vsel %vm303, %v926, 0.0
    %931 = vadd.xlane.f32.xlu0 %v930
    %v932 = vpop.xlane.xlu0 %931
    %v933 = vrcp.pop %v929
    %v934 = vrcp.pop %v932
    %v935 = vmul.f32 %v924, %v933
    %v936 = vmul.f32 %v926, %v934
    %v938 = vsel %vm303, %v174, 0
    %v941 = vsel %vm303, %v935, 0
    %v944 = vsel %vm303, %v936, 0
    %946 = vmatprep.subr.mxu0 0.0
    %947 = vmatpush1.xpose.msra.mxu0 %v941
    %948 = vmatprep.subr.mxu0 0.0
    %949 = vmatpush1.xpose.msra.mxu0 %v944
    %950 = vmatprep.subr.mxu0 0.0
    %951 = vmatpush1.xpose.msra.mxu0 0.0
    %952 = vmatprep.subr.mxu0 0.0
    %953 = vmatpush1.xpose.msra.mxu0 0.0
    %954 = vmatprep.subr.mxu0 0.0
    %955 = vmatpush1.xpose.msra.mxu0 0.0
    %956 = vmatprep.subr.mxu0 0.0
    %957 = vmatpush1.xpose.msra.mxu0 0.0
    %958 = vmatprep.subr.mxu0 0.0
    %959 = vmatpush1.xpose.msra.mxu0 0.0
    %960 = vmatprep.subr.mxu0 0.0
    %961 = vmatpush1.xpose.msra.mxu0 0.0
    %962 = vmatprep.subr.mxu0 0.0
    %963 = vmatpush1.xpose.msra.mxu0 0.0
    %964 = vmatprep.subr.mxu0 0.0
    %965 = vmatpush1.xpose.msra.mxu0 0.0
    %966 = vmatprep.subr.mxu0 0.0
    %967 = vmatpush1.xpose.msra.mxu0 0.0
    %968 = vmatprep.subr.mxu0 0.0
    %969 = vmatpush1.xpose.msra.mxu0 0.0
    %970 = vmatprep.subr.mxu0 0.0
    %971 = vmatpush1.xpose.msra.mxu0 0.0
    %972 = vmatprep.subr.mxu0 0.0
    %973 = vmatpush1.xpose.msra.mxu0 0.0
    %974 = vmatprep.subr.mxu0 0.0
    %975 = vmatpush1.xpose.msra.mxu0 0.0
    %976 = vmatprep.subr.mxu0 0.0
    %977 = vmatpush1.xpose.msra.mxu0 0.0
    %978 = vmatprep.subr.mxu0 0.0
    %979 = vmatpush1.xpose.msra.mxu0 0.0
    %980 = vmatprep.subr.mxu0 0.0
    %981 = vmatpush1.xpose.msra.mxu0 0.0
    %982 = vmatprep.subr.mxu0 0.0
    %983 = vmatpush1.xpose.msra.mxu0 0.0
    %984 = vmatprep.subr.mxu0 0.0
    %985 = vmatpush1.xpose.msra.mxu0 0.0
    %986 = vmatprep.subr.mxu0 0.0
    %987 = vmatpush1.xpose.msra.mxu0 0.0
    %988 = vmatprep.subr.mxu0 0.0
    %989 = vmatpush1.xpose.msra.mxu0 0.0
    %990 = vmatprep.subr.mxu0 0.0
    %991 = vmatpush1.xpose.msra.mxu0 0.0
    %992 = vmatprep.subr.mxu0 0.0
    %993 = vmatpush1.xpose.msra.mxu0 0.0
    %994 = vmatprep.subr.mxu0 0.0
    %995 = vmatpush1.xpose.msra.mxu0 0.0
    %996 = vmatprep.subr.mxu0 0.0
    %997 = vmatpush1.xpose.msra.mxu0 0.0
    %998 = vmatprep.subr.mxu0 0.0
    %999 = vmatpush1.xpose.msra.mxu0 0.0
    %1000 = vmatprep.subr.mxu0 0.0
    %1001 = vmatpush1.xpose.msra.mxu0 0.0
    %1002 = vmatprep.subr.mxu0 0.0
    %1003 = vmatpush1.xpose.msra.mxu0 0.0
    %1004 = vmatprep.subr.mxu0 0.0
    %1005 = vmatpush1.xpose.msra.mxu0 0.0
    %1006 = vmatprep.subr.mxu0 0.0
    %1007 = vmatpush1.xpose.msra.mxu0 0.0
    %1008 = vmatprep.subr.mxu0 0.0
    %1009 = vmatpush1.xpose.msra.mxu0 0.0
    %1010 = vmatprep.mubr.f32.mxu0 0.0
    %1011 = vmatmul.mubr.f32.gmra.mrb[0].mxu0 %v938
    %v1012 = vpop.f32.mrb[0].mxu0
    %v1013 = vadd.f32 0.0, %v1012
    %v1014 = vpop.f32.mrb[0].mxu0
    %1015 = vdwg.mxu0
    %v1016 = vsel %vm303, %v178, -inf
    %v1017 = vrot.slane %v1016, 4
    %v1018 = vmax.f32 %v1016, %v1017
    %v1019 = vrot.slane %v1018, 2
    %v1020 = vmax.f32 %v1018, %v1019
    %v1021 = vrot.slane %v1020, 1
    %v1022 = vmax.f32 %v1020, %v1021
    %v1023 = vsub.f32 %v178, %v1022
    %v1024 = vmul.f32 %v1023, 1.442695
    %v1025 = vpow.pop %v1024
    %v1026 = vsel %vm303, %v1025, 0.0
    %v1027 = vrot.slane %v1026, 4
    %v1028 = vadd.f32 %v1026, %v1027
    %v1029 = vrot.slane %v1028, 2
    %v1030 = vadd.f32 %v1028, %v1029
    %v1031 = vrot.slane %v1030, 1
    %v1032 = vadd.f32 %v1030, %v1031
    %v1033 = vrcp.pop %v1032
    %v1034 = vmul.f32 %v1025, %v1033
    %1035 = vmatprep.subr.mxu0 0.0
    %1036 = vmatpush1.msra.mxu0 %v1034
    %1037 = vmatprep.subr.mxu0 0.0
    %1038 = vmatpush1.msra.mxu0 0.0
    %1039 = vmatprep.subr.mxu0 0.0
    %1040 = vmatpush1.msra.mxu0 0.0
    %1041 = vmatprep.subr.mxu0 0.0
    %1042 = vmatpush1.msra.mxu0 0.0
    %1043 = vmatprep.subr.mxu0 0.0
    %1044 = vmatpush1.msra.mxu0 0.0
    %1045 = vmatprep.subr.mxu0 0.0
    %1046 = vmatpush1.msra.mxu0 0.0
    %1047 = vmatprep.subr.mxu0 0.0
    %1048 = vmatpush1.msra.mxu0 0.0
    %1049 = vmatprep.subr.mxu0 0.0
    %1050 = vmatpush1.msra.mxu0 0.0
    %1051 = vmatprep.subr.mxu0 0.0
    %1052 = vmatpush1.msra.mxu0 0.0
    %1053 = vmatprep.subr.mxu0 0.0
    %1054 = vmatpush1.msra.mxu0 0.0
    %1055 = vmatprep.subr.mxu0 0.0
    %1056 = vmatpush1.msra.mxu0 0.0
    %1057 = vmatprep.subr.mxu0 0.0
    %1058 = vmatpush1.msra.mxu0 0.0
    %1059 = vmatprep.subr.mxu0 0.0
    %1060 = vmatpush1.msra.mxu0 0.0
    %1061 = vmatprep.subr.mxu0 0.0
    %1062 = vmatpush1.msra.mxu0 0.0
    %1063 = vmatprep.subr.mxu0 0.0
    %1064 = vmatpush1.msra.mxu0 0.0
    %1065 = vmatprep.subr.mxu0 0.0
    %1066 = vmatpush1.msra.mxu0 0.0
    %1067 = vmatprep.subr.mxu0 0.0
    %1068 = vmatpush1.msra.mxu0 0.0
    %1069 = vmatprep.subr.mxu0 0.0
    %1070 = vmatpush1.msra.mxu0 0.0
    %1071 = vmatprep.subr.mxu0 0.0
    %1072 = vmatpush1.msra.mxu0 0.0
    %1073 = vmatprep.subr.mxu0 0.0
    %1074 = vmatpush1.msra.mxu0 0.0
    %1075 = vmatprep.subr.mxu0 0.0
    %1076 = vmatpush1.msra.mxu0 0.0
    %1077 = vmatprep.subr.mxu0 0.0
    %1078 = vmatpush1.msra.mxu0 0.0
    %1079 = vmatprep.subr.mxu0 0.0
    %1080 = vmatpush1.msra.mxu0 0.0
    %1081 = vmatprep.subr.mxu0 0.0
    %1082 = vmatpush1.msra.mxu0 0.0
    %1083 = vmatprep.subr.mxu0 0.0
    %1084 = vmatpush1.msra.mxu0 0.0
    %1085 = vmatprep.subr.mxu0 0.0
    %1086 = vmatpush1.msra.mxu0 0.0
    %1087 = vmatprep.subr.mxu0 0.0
    %1088 = vmatpush1.msra.mxu0 0.0
    %1089 = vmatprep.subr.mxu0 0.0
    %1090 = vmatpush1.msra.mxu0 0.0
    %1091 = vmatprep.subr.mxu0 0.0
    %1092 = vmatpush1.msra.mxu0 0.0
    %1093 = vmatprep.subr.mxu0 0.0
    %1094 = vmatpush1.msra.mxu0 0.0
    %1095 = vmatprep.subr.mxu0 0.0
    %1096 = vmatpush1.msra.mxu0 0.0
    %1097 = vmatprep.subr.mxu0 0.0
    %1098 = vmatpush1.msra.mxu0 0.0
    %1099 = vmatprep.mubr.f32.mxu0 0.0
    %1100 = vmatmul.mubr.f32.gmra.mrb[0].mxu0 %v425
    %v1101 = vpop.f32.mrb[0].mxu0
    %v1102 = vadd.f32 1.0, %v1101
    %v1103 = vpop.f32.mrb[0].mxu0
    %1104 = vdwg.mxu0
    %v1105 = vmul.f32 %v1013, %v1102
    %1106 = vxpose.xlu0.b32.start [1/16] %v167, 128
    %1107 = vxpose.xlu0.b32.cont [2/16] 0.0, 128
    %1108 = vxpose.xlu0.b32.cont [3/16] 0.0, 128
    %1109 = vxpose.xlu0.b32.cont [4/16] 0.0, 128
    %1110 = vxpose.xlu0.b32.cont [5/16] 0.0, 128
    %1111 = vxpose.xlu0.b32.cont [6/16] 0.0, 128
    %1112 = vxpose.xlu0.b32.cont [7/16] 0.0, 128
    %1113 = vxpose.xlu0.b32.cont [8/16] 0.0, 128
    %1114 = vxpose.xlu0.b32.cont [9/16] 0.0, 128
    %1115 = vxpose.xlu0.b32.cont [10/16] 0.0, 128
    %1116 = vxpose.xlu0.b32.cont [11/16] 0.0, 128
    %1117 = vxpose.xlu0.b32.cont [12/16] 0.0, 128
    %1118 = vxpose.xlu0.b32.cont [13/16] 0.0, 128
    %1119 = vxpose.xlu0.b32.cont [14/16] 0.0, 128
    %1120 = vxpose.xlu0.b32.cont [15/16] 0.0, 128
    %1121 = vxpose.xlu0.b32.end [16/16] 0.0, 128
    %v1122 = vpop.trf.xlu0
    %v1123 = vpop.trf.xlu0
    %v1124 = vpop.trf.xlu0
    %v1125 = vpop.trf.xlu0
    %v1126 = vpop.trf.xlu0
    %v1127 = vpop.trf.xlu0
    %v1128 = vpop.trf.xlu0
    %v1129 = vpop.trf.xlu0
    %v1130 = vpop.trf.xlu0
    %v1131 = vpop.trf.xlu0
    %v1132 = vpop.trf.xlu0
    %v1133 = vpop.trf.xlu0
    %v1134 = vpop.trf.xlu0
    %v1135 = vpop.trf.xlu0
    %v1136 = vpop.trf.xlu0
    %v1137 = vpop.trf.xlu0
    %v1139 = vsel %vm221, %v1122, 0
    %v1142 = vsel %vm221, %v1123, 0
    %1144 = vmatprep.subr.mxu0 0.0
    %1145 = vmatpush1.msra.mxu0 %v171
    %1146 = vmatprep.subr.mxu0 0.0
    %1147 = vmatpush1.msra.mxu0 0.0
    %1148 = vmatprep.subr.mxu0 0.0
    %1149 = vmatpush1.msra.mxu0 0.0
    %1150 = vmatprep.subr.mxu0 0.0
    %1151 = vmatpush1.msra.mxu0 0.0
    %1152 = vmatprep.subr.mxu0 0.0
    %1153 = vmatpush1.msra.mxu0 0.0
    %1154 = vmatprep.subr.mxu0 0.0
    %1155 = vmatpush1.msra.mxu0 0.0
    %1156 = vmatprep.subr.mxu0 0.0
    %1157 = vmatpush1.msra.mxu0 0.0
    %1158 = vmatprep.subr.mxu0 0.0
    %1159 = vmatpush1.msra.mxu0 0.0
    %1160 = vmatprep.subr.mxu0 0.0
    %1161 = vmatpush1.msra.mxu0 0.0
    %1162 = vmatprep.subr.mxu0 0.0
    %1163 = vmatpush1.msra.mxu0 0.0
    %1164 = vmatprep.subr.mxu0 0.0
    %1165 = vmatpush1.msra.mxu0 0.0
    %1166 = vmatprep.subr.mxu0 0.0
    %1167 = vmatpush1.msra.mxu0 0.0
    %1168 = vmatprep.subr.mxu0 0.0
    %1169 = vmatpush1.msra.mxu0 0.0
    %1170 = vmatprep.subr.mxu0 0.0
    %1171 = vmatpush1.msra.mxu0 0.0
    %1172 = vmatprep.subr.mxu0 0.0
    %1173 = vmatpush1.msra.mxu0 0.0
    %1174 = vmatprep.subr.mxu0 0.0
    %1175 = vmatpush1.msra.mxu0 0.0
    %1176 = vmatprep.subr.mxu0 0.0
    %1177 = vmatpush1.msra.mxu0 0.0
    %1178 = vmatprep.subr.mxu0 0.0
    %1179 = vmatpush1.msra.mxu0 0.0
    %1180 = vmatprep.subr.mxu0 0.0
    %1181 = vmatpush1.msra.mxu0 0.0
    %1182 = vmatprep.subr.mxu0 0.0
    %1183 = vmatpush1.msra.mxu0 0.0
    %1184 = vmatprep.subr.mxu0 0.0
    %1185 = vmatpush1.msra.mxu0 0.0
    %1186 = vmatprep.subr.mxu0 0.0
    %1187 = vmatpush1.msra.mxu0 0.0
    %1188 = vmatprep.subr.mxu0 0.0
    %1189 = vmatpush1.msra.mxu0 0.0
    %1190 = vmatprep.subr.mxu0 0.0
    %1191 = vmatpush1.msra.mxu0 0.0
    %1192 = vmatprep.subr.mxu0 0.0
    %1193 = vmatpush1.msra.mxu0 0.0
    %1194 = vmatprep.subr.mxu0 0.0
    %1195 = vmatpush1.msra.mxu0 0.0
    %1196 = vmatprep.subr.mxu0 0.0
    %1197 = vmatpush1.msra.mxu0 0.0
    %1198 = vmatprep.subr.mxu0 0.0
    %1199 = vmatpush1.msra.mxu0 0.0
    %1200 = vmatprep.subr.mxu0 0.0
    %1201 = vmatpush1.msra.mxu0 0.0
    %1202 = vmatprep.subr.mxu0 0.0
    %1203 = vmatpush1.msra.mxu0 0.0
    %1204 = vmatprep.subr.mxu0 0.0
    %1205 = vmatpush1.msra.mxu0 0.0
    %1206 = vmatprep.subr.mxu0 0.0
    %1207 = vmatpush1.msra.mxu0 0.0
    %1208 = vmatprep.mubr.f32.mxu0 0.0
    %1209 = vmatmul.mubr.f32.gmra.mrb[0].mxu0 %v1139
    %v1210 = vpop.f32.mrb[0].mxu0
    %v1211 = vadd.f32 %v187, %v1210
    %v1212 = vpop.f32.mrb[0].mxu0
    %1213 = vmatprep.mubr.f32.mxu0 0.0
    %1214 = vmatmul.mubr.f32.gmra.mrb[0].mxu0 %v1142
    %v1215 = vpop.f32.mrb[0].mxu0
    %v1216 = vadd.f32 %v188, %v1215
    %v1217 = vpop.f32.mrb[0].mxu0
    %1218 = vdwg.mxu0
    %v1219 = vsel %vm303, %v1211, -inf
    %1220 = vmax.xlane.f32.xlu0 %v1219
    %v1221 = vpop.xlane.xlu0 %1220
    %v1222 = vsel %vm303, %v1216, -inf
    %1223 = vmax.xlane.f32.xlu0 %v1222
    %v1224 = vpop.xlane.xlu0 %1223
    %v1225 = vsub.f32 %v1211, %v1221
    %v1226 = vsub.f32 %v1216, %v1224
    %v1227 = vmul.f32 %v1225, 1.442695
    %v1228 = vpow.pop %v1227
    %v1229 = vmul.f32 %v1226, 1.442695
    %v1230 = vpow.pop %v1229
    %v1231 = vsel %vm303, %v1228, 0.0
    %1232 = vadd.xlane.f32.xlu0 %v1231
    %v1233 = vpop.xlane.xlu0 %1232
    %v1234 = vsel %vm303, %v1230, 0.0
    %1235 = vadd.xlane.f32.xlu0 %v1234
    %v1236 = vpop.xlane.xlu0 %1235
    %v1237 = vrcp.pop %v1233
    %v1238 = vrcp.pop %v1236
    %v1239 = vmul.f32 %v1228, %v1237
    %v1240 = vmul.f32 %v1230, %v1238
    %v1242 = vsel %vm303, %v175, 0
    %v1245 = vsel %vm303, %v1239, 0
    %v1248 = vsel %vm303, %v1240, 0
    %1250 = vmatprep.subr.mxu0 0.0
    %1251 = vmatpush1.xpose.msra.mxu0 %v1245
    %1252 = vmatprep.subr.mxu0 0.0
    %1253 = vmatpush1.xpose.msra.mxu0 %v1248
    %1254 = vmatprep.subr.mxu0 0.0
    %1255 = vmatpush1.xpose.msra.mxu0 0.0
    %1256 = vmatprep.subr.mxu0 0.0
    %1257 = vmatpush1.xpose.msra.mxu0 0.0
    %1258 = vmatprep.subr.mxu0 0.0
    %1259 = vmatpush1.xpose.msra.mxu0 0.0
    %1260 = vmatprep.subr.mxu0 0.0
    %1261 = vmatpush1.xpose.msra.mxu0 0.0
    %1262 = vmatprep.subr.mxu0 0.0
    %1263 = vmatpush1.xpose.msra.mxu0 0.0
    %1264 = vmatprep.subr.mxu0 0.0
    %1265 = vmatpush1.xpose.msra.mxu0 0.0
    %1266 = vmatprep.subr.mxu0 0.0
    %1267 = vmatpush1.xpose.msra.mxu0 0.0
    %1268 = vmatprep.subr.mxu0 0.0
    %1269 = vmatpush1.xpose.msra.mxu0 0.0
    %1270 = vmatprep.subr.mxu0 0.0
    %1271 = vmatpush1.xpose.msra.mxu0 0.0
    %1272 = vmatprep.subr.mxu0 0.0
    %1273 = vmatpush1.xpose.msra.mxu0 0.0
    %1274 = vmatprep.subr.mxu0 0.0
    %1275 = vmatpush1.xpose.msra.mxu0 0.0
    %1276 = vmatprep.subr.mxu0 0.0
    %1277 = vmatpush1.xpose.msra.mxu0 0.0
    %1278 = vmatprep.subr.mxu0 0.0
    %1279 = vmatpush1.xpose.msra.mxu0 0.0
    %1280 = vmatprep.subr.mxu0 0.0
    %1281 = vmatpush1.xpose.msra.mxu0 0.0
    %1282 = vmatprep.subr.mxu0 0.0
    %1283 = vmatpush1.xpose.msra.mxu0 0.0
    %1284 = vmatprep.subr.mxu0 0.0
    %1285 = vmatpush1.xpose.msra.mxu0 0.0
    %1286 = vmatprep.subr.mxu0 0.0
    %1287 = vmatpush1.xpose.msra.mxu0 0.0
    %1288 = vmatprep.subr.mxu0 0.0
    %1289 = vmatpush1.xpose.msra.mxu0 0.0
    %1290 = vmatprep.subr.mxu0 0.0
    %1291 = vmatpush1.xpose.msra.mxu0 0.0
    %1292 = vmatprep.subr.mxu0 0.0
    %1293 = vmatpush1.xpose.msra.mxu0 0.0
    %1294 = vmatprep.subr.mxu0 0.0
    %1295 = vmatpush1.xpose.msra.mxu0 0.0
    %1296 = vmatprep.subr.mxu0 0.0
    %1297 = vmatpush1.xpose.msra.mxu0 0.0
    %1298 = vmatprep.subr.mxu0 0.0
    %1299 = vmatpush1.xpose.msra.mxu0 0.0
    %1300 = vmatprep.subr.mxu0 0.0
    %1301 = vmatpush1.xpose.msra.mxu0 0.0
    %1302 = vmatprep.subr.mxu0 0.0
    %1303 = vmatpush1.xpose.msra.mxu0 0.0
    %1304 = vmatprep.subr.mxu0 0.0
    %1305 = vmatpush1.xpose.msra.mxu0 0.0
    %1306 = vmatprep.subr.mxu0 0.0
    %1307 = vmatpush1.xpose.msra.mxu0 0.0
    %1308 = vmatprep.subr.mxu0 0.0
    %1309 = vmatpush1.xpose.msra.mxu0 0.0
    %1310 = vmatprep.subr.mxu0 0.0
    %1311 = vmatpush1.xpose.msra.mxu0 0.0
    %1312 = vmatprep.subr.mxu0 0.0
    %1313 = vmatpush1.xpose.msra.mxu0 0.0
    %1314 = vmatprep.mubr.f32.mxu0 0.0
    %1315 = vmatmul.mubr.f32.gmra.mrb[0].mxu0 %v1242
    %v1316 = vpop.f32.mrb[0].mxu0
    %v1317 = vadd.f32 0.0, %v1316
    %v1318 = vpop.f32.mrb[0].mxu0
    %1319 = vdwg.mxu0
    %v1320 = vsel %vm303, %v179, -inf
    %v1321 = vrot.slane %v1320, 4
    %v1322 = vmax.f32 %v1320, %v1321
    %v1323 = vrot.slane %v1322, 2
    %v1324 = vmax.f32 %v1322, %v1323
    %v1325 = vrot.slane %v1324, 1
    %v1326 = vmax.f32 %v1324, %v1325
    %v1327 = vsub.f32 %v179, %v1326
    %v1328 = vmul.f32 %v1327, 1.442695
    %v1329 = vpow.pop %v1328
    %v1330 = vsel %vm303, %v1329, 0.0
    %v1331 = vrot.slane %v1330, 4
    %v1332 = vadd.f32 %v1330, %v1331
    %v1333 = vrot.slane %v1332, 2
    %v1334 = vadd.f32 %v1332, %v1333
    %v1335 = vrot.slane %v1334, 1
    %v1336 = vadd.f32 %v1334, %v1335
    %v1337 = vrcp.pop %v1336
    %v1338 = vmul.f32 %v1329, %v1337
    %1339 = vmatprep.subr.mxu0 0.0
    %1340 = vmatpush1.msra.mxu0 %v1338
    %1341 = vmatprep.subr.mxu0 0.0
    %1342 = vmatpush1.msra.mxu0 0.0
    %1343 = vmatprep.subr.mxu0 0.0
    %1344 = vmatpush1.msra.mxu0 0.0
    %1345 = vmatprep.subr.mxu0 0.0
    %1346 = vmatpush1.msra.mxu0 0.0
    %1347 = vmatprep.subr.mxu0 0.0
    %1348 = vmatpush1.msra.mxu0 0.0
    %1349 = vmatprep.subr.mxu0 0.0
    %1350 = vmatpush1.msra.mxu0 0.0
    %1351 = vmatprep.subr.mxu0 0.0
    %1352 = vmatpush1.msra.mxu0 0.0
    %1353 = vmatprep.subr.mxu0 0.0
    %1354 = vmatpush1.msra.mxu0 0.0
    %1355 = vmatprep.subr.mxu0 0.0
    %1356 = vmatpush1.msra.mxu0 0.0
    %1357 = vmatprep.subr.mxu0 0.0
    %1358 = vmatpush1.msra.mxu0 0.0
    %1359 = vmatprep.subr.mxu0 0.0
    %1360 = vmatpush1.msra.mxu0 0.0
    %1361 = vmatprep.subr.mxu0 0.0
    %1362 = vmatpush1.msra.mxu0 0.0
    %1363 = vmatprep.subr.mxu0 0.0
    %1364 = vmatpush1.msra.mxu0 0.0
    %1365 = vmatprep.subr.mxu0 0.0
    %1366 = vmatpush1.msra.mxu0 0.0
    %1367 = vmatprep.subr.mxu0 0.0
    %1368 = vmatpush1.msra.mxu0 0.0
    %1369 = vmatprep.subr.mxu0 0.0
    %1370 = vmatpush1.msra.mxu0 0.0
    %1371 = vmatprep.subr.mxu0 0.0
    %1372 = vmatpush1.msra.mxu0 0.0
    %1373 = vmatprep.subr.mxu0 0.0
    %1374 = vmatpush1.msra.mxu0 0.0
    %1375 = vmatprep.subr.mxu0 0.0
    %1376 = vmatpush1.msra.mxu0 0.0
    %1377 = vmatprep.subr.mxu0 0.0
    %1378 = vmatpush1.msra.mxu0 0.0
    %1379 = vmatprep.subr.mxu0 0.0
    %1380 = vmatpush1.msra.mxu0 0.0
    %1381 = vmatprep.subr.mxu0 0.0
    %1382 = vmatpush1.msra.mxu0 0.0
    %1383 = vmatprep.subr.mxu0 0.0
    %1384 = vmatpush1.msra.mxu0 0.0
    %1385 = vmatprep.subr.mxu0 0.0
    %1386 = vmatpush1.msra.mxu0 0.0
    %1387 = vmatprep.subr.mxu0 0.0
    %1388 = vmatpush1.msra.mxu0 0.0
    %1389 = vmatprep.subr.mxu0 0.0
    %1390 = vmatpush1.msra.mxu0 0.0
    %1391 = vmatprep.subr.mxu0 0.0
    %1392 = vmatpush1.msra.mxu0 0.0
    %1393 = vmatprep.subr.mxu0 0.0
    %1394 = vmatpush1.msra.mxu0 0.0
    %1395 = vmatprep.subr.mxu0 0.0
    %1396 = vmatpush1.msra.mxu0 0.0
    %1397 = vmatprep.subr.mxu0 0.0
    %1398 = vmatpush1.msra.mxu0 0.0
    %1399 = vmatprep.subr.mxu0 0.0
    %1400 = vmatpush1.msra.mxu0 0.0
    %1401 = vmatprep.subr.mxu0 0.0
    %1402 = vmatpush1.msra.mxu0 0.0
    %1403 = vmatprep.mubr.f32.mxu0 0.0
    %1404 = vmatmul.mubr.f32.gmra.mrb[0].mxu0 %v425
    %v1405 = vpop.f32.mrb[0].mxu0
    %v1406 = vadd.f32 1.0, %v1405
    %v1407 = vpop.f32.mrb[0].mxu0
    %1408 = vdwg.mxu0
    %v1409 = vmul.f32 %v1317, %v1406
    %v1410 = vld [vmem:[%s5] sm:$0xff]
    %v1411 = vld [vmem:[%s5 + $0x8] sm:$0xff]
    %v1412 = vld [vmem:[%s5 + $0x10] sm:$0xff]
    %v1413 = vld [vmem:[%s5 + $0x18] sm:$0xff]
    %1414 = vxpose.xlu0.b32.start [1/16] %v497, 128
    %1415 = vxpose.xlu0.b32.cont [2/16] %v801, 128
    %1416 = vxpose.xlu0.b32.cont [3/16] %v1105, 128
    %1417 = vxpose.xlu0.b32.cont [4/16] %v1409, 128
    %1418 = vxpose.xlu0.b32.cont [5/16] 0.0, 128
    %1419 = vxpose.xlu0.b32.cont [6/16] 0.0, 128
    %1420 = vxpose.xlu0.b32.cont [7/16] 0.0, 128
    %1421 = vxpose.xlu0.b32.cont [8/16] 0.0, 128
    %1422 = vxpose.xlu0.b32.cont [9/16] 0.0, 128
    %1423 = vxpose.xlu0.b32.cont [10/16] 0.0, 128
    %1424 = vxpose.xlu0.b32.cont [11/16] 0.0, 128
    %1425 = vxpose.xlu0.b32.cont [12/16] 0.0, 128
    %1426 = vxpose.xlu0.b32.cont [13/16] 0.0, 128
    %1427 = vxpose.xlu0.b32.cont [14/16] 0.0, 128
    %1428 = vxpose.xlu0.b32.cont [15/16] 0.0, 128
    %1429 = vxpose.xlu0.b32.end [16/16] 0.0, 128
    %v1430 = vpop.trf.xlu0
    %v1431 = vpop.trf.xlu0
    %v1432 = vpop.trf.xlu0
    %v1433 = vpop.trf.xlu0
    %v1434 = vpop.trf.xlu0
    %v1435 = vpop.trf.xlu0
    %v1436 = vpop.trf.xlu0
    %v1437 = vpop.trf.xlu0
    %v1438 = vpop.trf.xlu0
    %v1439 = vpop.trf.xlu0
    %v1440 = vpop.trf.xlu0
    %v1441 = vpop.trf.xlu0
    %v1442 = vpop.trf.xlu0
    %v1443 = vpop.trf.xlu0
    %v1444 = vpop.trf.xlu0
    %v1445 = vpop.trf.xlu0
    %v1447 = vsel %vm31, %v1430, 0
    %v1450 = vsel %vm31, %v1431, 0
    %1452 = vmatprep.subr.mxu0 0.0
    %1453 = vmatpush1.msra.mxu0 %v1410
    %1454 = vmatprep.subr.mxu0 0.0
    %1455 = vmatpush1.msra.mxu0 %v1411
    %1456 = vmatprep.subr.mxu0 0.0
    %1457 = vmatpush1.msra.mxu0 %v1412
    %1458 = vmatprep.subr.mxu0 0.0
    %1459 = vmatpush1.msra.mxu0 %v1413
    %1460 = vmatprep.subr.mxu0 0.0
    %1461 = vmatpush1.msra.mxu0 0.0
    %1462 = vmatprep.subr.mxu0 0.0
    %1463 = vmatpush1.msra.mxu0 0.0
    %1464 = vmatprep.subr.mxu0 0.0
    %1465 = vmatpush1.msra.mxu0 0.0
    %1466 = vmatprep.subr.mxu0 0.0
    %1467 = vmatpush1.msra.mxu0 0.0
    %1468 = vmatprep.subr.mxu0 0.0
    %1469 = vmatpush1.msra.mxu0 0.0
    %1470 = vmatprep.subr.mxu0 0.0
    %1471 = vmatpush1.msra.mxu0 0.0
    %1472 = vmatprep.subr.mxu0 0.0
    %1473 = vmatpush1.msra.mxu0 0.0
    %1474 = vmatprep.subr.mxu0 0.0
    %1475 = vmatpush1.msra.mxu0 0.0
    %1476 = vmatprep.subr.mxu0 0.0
    %1477 = vmatpush1.msra.mxu0 0.0
    %1478 = vmatprep.subr.mxu0 0.0
    %1479 = vmatpush1.msra.mxu0 0.0
    %1480 = vmatprep.subr.mxu0 0.0
    %1481 = vmatpush1.msra.mxu0 0.0
    %1482 = vmatprep.subr.mxu0 0.0
    %1483 = vmatpush1.msra.mxu0 0.0
    %1484 = vmatprep.subr.mxu0 0.0
    %1485 = vmatpush1.msra.mxu0 0.0
    %1486 = vmatprep.subr.mxu0 0.0
    %1487 = vmatpush1.msra.mxu0 0.0
    %1488 = vmatprep.subr.mxu0 0.0
    %1489 = vmatpush1.msra.mxu0 0.0
    %1490 = vmatprep.subr.mxu0 0.0
    %1491 = vmatpush1.msra.mxu0 0.0
    %1492 = vmatprep.subr.mxu0 0.0
    %1493 = vmatpush1.msra.mxu0 0.0
    %1494 = vmatprep.subr.mxu0 0.0
    %1495 = vmatpush1.msra.mxu0 0.0
    %1496 = vmatprep.subr.mxu0 0.0
    %1497 = vmatpush1.msra.mxu0 0.0
    %1498 = vmatprep.subr.mxu0 0.0
    %1499 = vmatpush1.msra.mxu0 0.0
    %1500 = vmatprep.subr.mxu0 0.0
    %1501 = vmatpush1.msra.mxu0 0.0
    %1502 = vmatprep.subr.mxu0 0.0
    %1503 = vmatpush1.msra.mxu0 0.0
    %1504 = vmatprep.subr.mxu0 0.0
    %1505 = vmatpush1.msra.mxu0 0.0
    %1506 = vmatprep.subr.mxu0 0.0
    %1507 = vmatpush1.msra.mxu0 0.0
    %1508 = vmatprep.subr.mxu0 0.0
    %1509 = vmatpush1.msra.mxu0 0.0
    %1510 = vmatprep.subr.mxu0 0.0
    %1511 = vmatpush1.msra.mxu0 0.0
    %1512 = vmatprep.subr.mxu0 0.0
    %1513 = vmatpush1.msra.mxu0 0.0
    %1514 = vmatprep.subr.mxu0 0.0
    %1515 = vmatpush1.msra.mxu0 0.0
    %1516 = vmatprep.mubr.f32.mxu0 0.0
    %1517 = vmatmul.mubr.f32.gmra.mrb[0].mxu0 %v1447
    %v1518 = vpop.f32.mrb[0].mxu0
    %v1519 = vadd.f32 0.0, %v1518
    %v1520 = vpop.f32.mrb[0].mxu0
    %1521 = vmatprep.mubr.f32.mxu0 0.0
    %1522 = vmatmul.mubr.f32.gmra.mrb[0].mxu0 %v1450
    %v1523 = vpop.f32.mrb[0].mxu0
    %v1524 = vadd.f32 0.0, %v1523
    %v1525 = vpop.f32.mrb[0].mxu0
    %1526 = vdwg.mxu0
    %v1527 = vadd.f32 %v27, %v1519
    %v1528 = vadd.f32 %v28, %v1524
    %1529 = vst.msk [vmem:[#allocation2] sm:$0xff] %vm31, %v1527
    %1530 = vst.msk [vmem:[#allocation2 + $0x8] sm:$0xff] %vm31, %v1528
    // Predicated region
    $region30: #{tpt_layer_self_attention.1} parent=1 // pred_check
      _
    $region31: #{tpt_layer_self_attention.1} parent=1 // pred_check_branch
      %1532 = sbr.rel (0) target = $region33
    $region32: #{tpt_layer_self_attention.1} parent=1 // pred_region
      %s1534 = ssub.s32 256, 256
      %1535 = vsyncadd [#allocation3], %s1534
      %s1536 = sshll.u32 [#allocation2], 4
      %s1537 = int_to_ptr.vmem [resolvable:$true] %s1536
      %1542 = dma.vmem_to_hbm [thread:$0]  %s1537, 256, %s7, [#allocation3], 128, 128, 8
    $region33: #{tpt_layer_self_attention.1} parent=1 // pred_fallthru
      _
    // Predicated region
    $region34: #{tpt_layer_self_attention.1} parent=1 // pred_check
      _
    $region35: #{tpt_layer_self_attention.1} parent=1 // pred_check_branch
      %1544 = sbr.rel (0) target = $region37
    $region36: #{tpt_layer_self_attention.1} parent=1 // pred_region
      %1545 = dma.done [#allocation3], 256
    $region37: #{tpt_layer_self_attention.1} parent=1 // pred_fallthru
      _
    %1546 = vsyncpa [#allocation3], 1

</llo_original>
